<compile_context>
chip_gen: v6e
topology: v6e:2x2x1
jax: 0.10.0
libtpu: 0.0.40
codegen_flags: <defaults>
</compile_context>

<pallas_src>
import functools

import jax
import jax.numpy as jnp
from jax.experimental import pallas as pl
from jax.experimental.pallas import tpu as pltpu


# -----------------------------------------------------------------------------
# Fused kernel: embed -> GRU recurrence -> classifier -> log_softmax
# -----------------------------------------------------------------------------
def _make_kernel(classes):
    def kernel(x_ref, we_ref, be_ref,        # input + embed
               wi3_ref, gb_ref, wh3_ref,     # gate-fused GRU weights / biases
               w1_ref, b1_ref, w2_ref, b2_ref,  # classifier head
               o_ref,                        # (BP, CP) log-probs (lane-padded)
               g_scr):                       # (T*BP, 3H) fused gate scratch
        T = w1_ref.shape[0]
        TBP = x_ref.shape[0]
        BP = TBP // T
        H = wh3_ref.shape[0]
        H2 = 2 * H
        N1 = b1_ref.shape[1]
        CP = o_ref.shape[1]
        dt = wh3_ref.dtype          # MXU operand dtype (f32 or bf16)

        # ---- embed: relu(x @ We + be) for all T*BP rows in one MXU pass ----
        emb = jnp.dot(x_ref[...], we_ref[...], preferred_element_type=jnp.float32)
        emb = jnp.maximum(emb + be_ref[...], 0.0)                     # (T*BP, E) f32

        # ---- hoisted, gate-fused input projections (off the serial chain) ----
        # lanes [0:H)=r, [H:2H)=z, [2H:3H)=n; r/z/n input+hidden biases folded
        # in via gb row 0 (= [b_ir+b_hr | b_iz+b_hz | b_in]).
        g_scr[...] = (jnp.dot(emb.astype(dt), wi3_ref[...],
                              preferred_element_type=jnp.float32)
                      + gb_ref[0:1, :])                               # (T*BP, 3H) f32

        # ---- GRU recurrence (PyTorch gate order r, z, n), fully unrolled ----
        # flatten + Linear(T*H, N1) folded in as acc += h_t @ W1[t].
        def step(t, carry):
            h, acc = carry
            # BP is padded to a multiple of 8 in the wrapper, so t*BP is always
            # 8-aligned; keep both in sync if the padding ever changes.
            row = pl.multiple_of(t * BP, 8)
            g = g_scr[pl.ds(row, BP), :]                              # (BP, 3H) lane-dense
            # one recurrent MXU push per step; gb row 1 = [0 | 0 | b_hn]
            hall = (jnp.dot(h.astype(dt), wh3_ref[...],
                            preferred_element_type=jnp.float32)
                    + gb_ref[1:2, :])                                 # (BP, 3H)
            rz = jax.nn.sigmoid(g[:, :H2] + hall[:, :H2])             # one sigmoid, 2H lanes
            r = rz[:, :H]
            z = rz[:, H:]
            n = jnp.tanh(g[:, H2:] + r * hall[:, H2:])                # n = tanh(gn + r*(h@Whn+bhn))
            h_new = (1.0 - z) * n + z * h
            acc = acc + jnp.dot(h_new.astype(dt), w1_ref[t],
                                preferred_element_type=jnp.float32)
            return h_new, acc

        h0 = jnp.zeros((BP, H), jnp.float32)
        acc0 = jnp.broadcast_to(b1_ref[...], (BP, N1))                # fold b1 into acc
        _, acc = jax.lax.fori_loop(0, T, step, (h0, acc0), unroll=True)

        # ---- classifier tail: ReLU -> Linear -> ReLU -> LogSoftmax ----
        h1 = jnp.maximum(acc, 0.0)                                    # (BP, N1)
        logits = (jnp.dot(h1.astype(dt), w2_ref[...],
                          preferred_element_type=jnp.float32) + b2_ref[...])
        logits = jnp.maximum(logits, 0.0)
        lane = jax.lax.broadcasted_iota(jnp.int32, (1, CP), 1)
        logits = jnp.where(lane < classes, logits, -1e30)             # mask pad lanes
        m = jnp.max(logits, axis=1, keepdims=True)
        lse = jnp.log(jnp.sum(jnp.exp(logits - m), axis=1, keepdims=True)) + m
        o_ref[...] = logits - lse

    return kernel


# -----------------------------------------------------------------------------
# Wrapper
# -----------------------------------------------------------------------------
@functools.partial(jax.jit, static_argnames=("classes", "mxu_dtype"))
def rnnbase_forward(input_data, params, classes, mxu_dtype=jnp.float32):
    B, T, F = input_data.shape
    H3 = params["wh3"].shape[1]          # 3*H
    CP = params["w2_pad"].shape[1]

    # Pad batch to a sublane multiple (8) so per-timestep scratch reads are
    # 8-aligned dynamic slices (matches pl.multiple_of hint in the kernel).
    BP = ((B + 7) // 8) * 8
    x = jnp.pad(input_data, ((0, BP - B), (0, 0), (0, 0)))
    # Time-major flatten: row t*BP + b.
    x2d = jnp.transpose(x, (1, 0, 2)).reshape(T * BP, F)

    # MXU operands (weights + input) in mxu_dtype; biases & accumulation in f32.
    cast = lambda a: a.astype(mxu_dtype)

    vmem = pl.BlockSpec(memory_space=pltpu.MemorySpace.VMEM)
    out_pad = pl.pallas_call(
        _make_kernel(classes),
        out_shape=jax.ShapeDtypeStruct((BP, CP), jnp.float32),
        in_specs=[vmem] * 10,
        out_specs=vmem,
        scratch_shapes=[pltpu.VMEM((T * BP, H3), jnp.float32)],
    )(cast(x2d), cast(params["embed_w"]), params["embed_b"],
      cast(params["wi3"]), params["gru_b"], cast(params["wh3"]),
      cast(params["w1_r"]), params["b1"], cast(params["w2_pad"]), params["b2_pad"])

    return out_pad[:B, :classes]


# -----------------------------------------------------------------------------
# Pure-JAX reference (mirrors the PyTorch module, eval mode)
# -----------------------------------------------------------------------------
def reference_forward(x, params):
    B, T, F = x.shape
    H = params["w_hr"].shape[0]
    emb = jax.nn.relu(x.reshape(B * T, F) @ params["embed_w"] + params["embed_b"])
    emb = emb.reshape(B, T, -1)

    def cell(h, x_t):
        r = jax.nn.sigmoid(x_t @ params["w_ir"] + params["b_ir"]
                           + h @ params["w_hr"] + params["b_hr"])
        z = jax.nn.sigmoid(x_t @ params["w_iz"] + params["b_iz"]
                           + h @ params["w_hz"] + params["b_hz"])
        n = jnp.tanh(x_t @ params["w_in"] + params["b_in"]
                     + r * (h @ params["w_hn"] + params["b_hn"]))
        h_new = (1.0 - z) * n + z * h
        return h_new, h_new

    h0 = jnp.zeros((B, H), jnp.float32)
    _, hs = jax.lax.scan(cell, h0, jnp.transpose(emb, (1, 0, 2)))     # (T, B, H)
    flat = jnp.transpose(hs, (1, 0, 2)).reshape(B, T * H)
    h1 = jax.nn.relu(flat @ params["w1"] + params["b1"])
    logits = jax.nn.relu(h1 @ params["w2"] + params["b2"])
    return jax.nn.log_softmax(logits, axis=1)


# -----------------------------------------------------------------------------
# Parameter construction (gate-fused GRU weights, lane-padded classifier head)
# -----------------------------------------------------------------------------
def init_params(key, input_size, embedding_size, hidden_size, window_size, classes):
    F, E, H, T, C = input_size, embedding_size, hidden_size, window_size, classes
    CP = ((C + 127) // 128) * 128
    ks = jax.random.split(key, 18)

    def u(k, shape, scale):
        return jax.random.uniform(k, shape, jnp.float32, -scale, scale)

    s_e = 1.0 / (F ** 0.5)
    s_g = 1.0 / (H ** 0.5)
    s_1 = 1.0 / ((H * T) ** 0.5)
    s_2 = 1.0 / (256.0 ** 0.5)

    p = {
        # nn.Linear(F, E) stored transposed (F, E)
        "embed_w": u(ks[0], (F, E), s_e),
        "embed_b": u(ks[1], (1, E), s_e),
        # nn.GRU(E, H) split per gate (r, z, n), stored transposed (E, H)/(H, H)
        "w_ir": u(ks[2], (E, H), s_g), "w_iz": u(ks[3], (E, H), s_g), "w_in": u(ks[4], (E, H), s_g),
        "b_ir": u(ks[5], (1, H), s_g), "b_iz": u(ks[6], (1, H), s_g), "b_in": u(ks[7], (1, H), s_g),
        "w_hr": u(ks[8], (H, H), s_g), "w_hz": u(ks[9], (H, H), s_g), "w_hn": u(ks[10], (H, H), s_g),
        "b_hr": u(ks[11], (1, H), s_g), "b_hz": u(ks[12], (1, H), s_g), "b_hn": u(ks[13], (1, H), s_g),
        # classifier: Linear(H*T, 256), Linear(256, C)
        "w1": u(ks[14], (T * H, 256), s_1),
        "b1": u(ks[15], (1, 256), s_1),
        "w2": u(ks[16], (256, C), s_2),
        "b2": u(ks[17], (1, C), s_2),
    }

    # ---- kernel-side fused / pre-shaped parameters (built once, at init) ----
    # gate-fused input / hidden weights, lane order [r | z | n]
    p["wi3"] = jnp.concatenate([p["w_ir"], p["w_iz"], p["w_in"]], axis=1)   # (E, 3H)
    p["wh3"] = jnp.concatenate([p["w_hr"], p["w_hz"], p["w_hn"]], axis=1)   # (H, 3H)
    # packed biases: row 0 = [b_ir+b_hr | b_iz+b_hz | b_in], row 1 = [0 | 0 | b_hn]
    row0 = jnp.concatenate([p["b_ir"] + p["b_hr"], p["b_iz"] + p["b_hz"], p["b_in"]], axis=1)
    row1 = jnp.concatenate([jnp.zeros((1, 2 * H), jnp.float32), p["b_hn"]], axis=1)
    p["gru_b"] = jnp.concatenate([row0, row1], axis=0)                       # (2, 3H)
    # Linear(T*H, 256) pre-reshaped per timestep: row t*H + j -> [t, j, :]
    p["w1_r"] = p["w1"].reshape(T, H, 256)
    # lane-padded classifier head
    p["w2_pad"] = jnp.zeros((256, CP), jnp.float32).at[:, :C].set(p["w2"])
    p["b2_pad"] = jnp.zeros((1, CP), jnp.float32).at[:, :C].set(p["b2"])
    return p


if __name__ == "__main__":
    # Small shapes consistent with the module's forward:
    # input_data (B, window_size, input_size); classifier needs T == window_size.
    B, T, F = 2, 8, 16          # batch, window_size, input_size
    E, H, C = 32, 32, 5         # embedding_size, hidden_size, classes

    key = jax.random.PRNGKey(0)
    k_x, k_p = jax.random.split(key)
    x = jax.random.normal(k_x, (B, T, F), dtype=jnp.float32)
    params = init_params(k_p, input_size=F, embedding_size=E,
                         hidden_size=H, window_size=T, classes=C)

    ref = reference_forward(x, params)

    # f32 MXU path (correctness baseline, v5e-friendly)
    out = rnnbase_forward(x, params, classes=C)
    jax.block_until_ready(out)
    assert out.shape == (B, C), out.shape
    err = float(jnp.max(jnp.abs(out - ref)))
    assert err < 1e-4, f"max |pallas(f32) - reference| = {err}"

    # bf16 MXU-operand path (v6e/v7x perf suggestion): f32 accumulation and f32
    # VPU/EUP math; validated with the looser tolerance the review recommends.
    out_bf16 = rnnbase_forward(x, params, classes=C, mxu_dtype=jnp.bfloat16)
    jax.block_until_ready(out_bf16)
    err_bf16 = float(jnp.max(jnp.abs(out_bf16 - ref)))
    assert err_bf16 < 5e-2, f"max |pallas(bf16 MXU) - reference| = {err_bf16}"

    print("KERNEL_OK")
</pallas_src>

<mosaic_0001>
module attributes {stable_mosaic.version = 11 : i64} {
  func.func @kernel(%arg0: memref<64x16xf32, #tpu.memory_space<vmem>>, %arg1: memref<16x32xf32, #tpu.memory_space<vmem>>, %arg2: memref<1x32xf32, #tpu.memory_space<vmem>>, %arg3: memref<32x96xf32, #tpu.memory_space<vmem>>, %arg4: memref<2x96xf32, #tpu.memory_space<vmem>>, %arg5: memref<32x96xf32, #tpu.memory_space<vmem>>, %arg6: memref<8x32x256xf32, #tpu.memory_space<vmem>>, %arg7: memref<1x256xf32, #tpu.memory_space<vmem>>, %arg8: memref<256x128xf32, #tpu.memory_space<vmem>>, %arg9: memref<1x128xf32, #tpu.memory_space<vmem>>, %arg10: memref<8x128xf32, #tpu.memory_space<vmem>>, %arg11: memref<64x96xf32, #tpu.memory_space<vmem>>) attributes {dimension_semantics = [], scalar_prefetch = 0 : i64, scratch_operands = 1 : i64, tpu.core_type = #tpu.core_type<tc>} {
    %c0 = arith.constant 0 : index
    %c0_0 = arith.constant 0 : index
    %0 = vector.load %arg0[%c0, %c0_0] : memref<64x16xf32, #tpu.memory_space<vmem>>, vector<64x16xf32>
    %c0_1 = arith.constant 0 : index
    %c0_2 = arith.constant 0 : index
    %1 = vector.load %arg1[%c0_1, %c0_2] : memref<16x32xf32, #tpu.memory_space<vmem>>, vector<16x32xf32>
    %cst = arith.constant dense<0.000000e+00> : vector<64x32xf32>
    %2 = tpu.matmul %0, %1, %cst {dimension_numbers = #tpu.dot_dimension_numbers<[1], [0], [0], [1], [0, 0, 1, 1], [], []>} : vector<64x16xf32>, vector<16x32xf32>, vector<64x32xf32> -> vector<64x32xf32>
    %c0_3 = arith.constant 0 : index
    %c0_4 = arith.constant 0 : index
    %3 = vector.load %arg2[%c0_3, %c0_4] : memref<1x32xf32, #tpu.memory_space<vmem>>, vector<1x32xf32>
    %4 = vector.broadcast %3 : vector<1x32xf32> to vector<64x32xf32>
    %5 = arith.addf %2, %4 : vector<64x32xf32>
    %cst_5 = arith.constant 0.000000e+00 : f32
    %6 = vector.broadcast %cst_5 : f32 to vector<64x32xf32>
    %7 = arith.maximumf %5, %6 : vector<64x32xf32>
    %c0_6 = arith.constant 0 : index
    %c0_7 = arith.constant 0 : index
    %8 = vector.load %arg3[%c0_6, %c0_7] : memref<32x96xf32, #tpu.memory_space<vmem>>, vector<32x96xf32>
    %cst_8 = arith.constant dense<0.000000e+00> : vector<64x96xf32>
    %9 = tpu.matmul %7, %8, %cst_8 {dimension_numbers = #tpu.dot_dimension_numbers<[1], [0], [0], [1], [0, 0, 1, 1], [], []>} : vector<64x32xf32>, vector<32x96xf32>, vector<64x96xf32> -> vector<64x96xf32>
    %c0_9 = arith.constant 0 : index
    %c0_10 = arith.constant 0 : index
    %10 = vector.load %arg4[%c0_9, %c0_10] : memref<2x96xf32, #tpu.memory_space<vmem>>, vector<1x96xf32>
    %11 = vector.broadcast %10 : vector<1x96xf32> to vector<64x96xf32>
    %12 = arith.addf %9, %11 : vector<64x96xf32>
    %c0_11 = arith.constant 0 : index
    %c0_12 = arith.constant 0 : index
    %13 = vector.load %arg11[%c0_11, %c0_12] : memref<64x96xf32, #tpu.memory_space<vmem>>, vector<64x96xf32>
    tpu.vector_store %arg11[%c0_11, %c0_12], %12 {strides = array<i32>} : memref<64x96xf32, #tpu.memory_space<vmem>>, vector<64x96xf32>,
    %cst_13 = arith.constant 0.000000e+00 : f32
    %14 = vector.broadcast %cst_13 : f32 to vector<8x32xf32>
    %c0_14 = arith.constant 0 : index
    %c0_15 = arith.constant 0 : index
    %15 = vector.load %arg7[%c0_14, %c0_15] : memref<1x256xf32, #tpu.memory_space<vmem>>, vector<1x256xf32>
    %16 = vector.shape_cast %15 : vector<1x256xf32> to vector<1x256xf32>
    %17 = vector.broadcast %16 : vector<1x256xf32> to vector<8x256xf32>
    %c0_i32 = arith.constant 0 : i32
    %c8_i32 = arith.constant 8 : i32
    %18 = arith.muli %c0_i32, %c8_i32 : i32
    %19 = tpu.assume_multiple %18, 8 : i32
    %20 = arith.index_cast %19 : i32 to index
    %c0_16 = arith.constant 0 : index
    %21 = vector.load %arg11[%20, %c0_16] : memref<64x96xf32, #tpu.memory_space<vmem>>, vector<8x96xf32>
    %c0_17 = arith.constant 0 : index
    %c0_18 = arith.constant 0 : index
    %22 = vector.load %arg5[%c0_17, %c0_18] : memref<32x96xf32, #tpu.memory_space<vmem>>, vector<32x96xf32>
    %cst_19 = arith.constant dense<0.000000e+00> : vector<8x96xf32>
    %23 = tpu.matmul %14, %22, %cst_19 {dimension_numbers = #tpu.dot_dimension_numbers<[1], [0], [0], [1], [0, 0, 1, 1], [], []>} : vector<8x32xf32>, vector<32x96xf32>, vector<8x96xf32> -> vector<8x96xf32>
    %c1 = arith.constant 1 : index
    %c0_20 = arith.constant 0 : index
    %24 = vector.load %arg4[%c1, %c0_20] : memref<2x96xf32, #tpu.memory_space<vmem>>, vector<1x96xf32>
    %25 = vector.broadcast %24 : vector<1x96xf32> to vector<8x96xf32>
    %26 = arith.addf %23, %25 : vector<8x96xf32>
    %27 = vector.extract_strided_slice %21 {offsets = [0, 0], sizes = [8, 64], strides = [1, 1]} : vector<8x96xf32> to vector<8x64xf32>
    %28 = vector.extract_strided_slice %26 {offsets = [0, 0], sizes = [8, 64], strides = [1, 1]} : vector<8x96xf32> to vector<8x64xf32>
    %29 = arith.addf %27, %28 : vector<8x64xf32>
    %30 = arith.negf %29 : vector<8x64xf32>
    %31 = math.exp %30 : vector<8x64xf32>
    %cst_21 = arith.constant 1.000000e+00 : f32
    %32 = vector.broadcast %cst_21 : f32 to vector<8x64xf32>
    %33 = arith.addf %32, %31 : vector<8x64xf32>
    %34 = arith.divf %32, %33 : vector<8x64xf32>
    %35 = vector.extract_strided_slice %34 {offsets = [0, 0], sizes = [8, 32], strides = [1, 1]} : vector<8x64xf32> to vector<8x32xf32>
    %36 = vector.extract_strided_slice %34 {offsets = [0, 32], sizes = [8, 32], strides = [1, 1]} : vector<8x64xf32> to vector<8x32xf32>
    %37 = vector.extract_strided_slice %21 {offsets = [0, 64], sizes = [8, 32], strides = [1, 1]} : vector<8x96xf32> to vector<8x32xf32>
    %38 = vector.extract_strided_slice %26 {offsets = [0, 64], sizes = [8, 32], strides = [1, 1]} : vector<8x96xf32> to vector<8x32xf32>
    %39 = arith.mulf %35, %38 : vector<8x32xf32>
    %40 = arith.addf %37, %39 : vector<8x32xf32>
    %41 = math.tanh %40 : vector<8x32xf32>
    %cst_22 = arith.constant 1.000000e+00 : f32
    %42 = vector.broadcast %cst_22 : f32 to vector<8x32xf32>
    %43 = arith.subf %42, %36 : vector<8x32xf32>
    %44 = arith.mulf %43, %41 : vector<8x32xf32>
    %45 = arith.mulf %36, %14 : vector<8x32xf32>
    %46 = arith.addf %44, %45 : vector<8x32xf32>
    %47 = arith.index_cast %c0_i32 : i32 to index
    %c0_23 = arith.constant 0 : index
    %c0_24 = arith.constant 0 : index
    %48 = vector.load %arg6[%47, %c0_23, %c0_24] : memref<8x32x256xf32, #tpu.memory_space<vmem>>, vector<1x32x256xf32>
    %49 = vector.shape_cast %48 : vector<1x32x256xf32> to vector<32x256xf32>
    %cst_25 = arith.constant dense<0.000000e+00> : vector<8x256xf32>
    %50 = tpu.matmul %46, %49, %cst_25 {dimension_numbers = #tpu.dot_dimension_numbers<[1], [0], [0], [1], [0, 0, 1, 1], [], []>} : vector<8x32xf32>, vector<32x256xf32>, vector<8x256xf32> -> vector<8x256xf32>
    %51 = arith.addf %17, %50 : vector<8x256xf32>
    %c1_i32 = arith.constant 1 : i32
    %c8_i32_26 = arith.constant 8 : i32
    %52 = arith.muli %c1_i32, %c8_i32_26 : i32
    %53 = tpu.assume_multiple %52, 8 : i32
    %54 = arith.index_cast %53 : i32 to index
    %c0_27 = arith.constant 0 : index
    %55 = vector.load %arg11[%54, %c0_27] : memref<64x96xf32, #tpu.memory_space<vmem>>, vector<8x96xf32>
    %c0_28 = arith.constant 0 : index
    %c0_29 = arith.constant 0 : index
    %56 = vector.load %arg5[%c0_28, %c0_29] : memref<32x96xf32, #tpu.memory_space<vmem>>, vector<32x96xf32>
    %cst_30 = arith.constant dense<0.000000e+00> : vector<8x96xf32>
    %57 = tpu.matmul %46, %56, %cst_30 {dimension_numbers = #tpu.dot_dimension_numbers<[1], [0], [0], [1], [0, 0, 1, 1], [], []>} : vector<8x32xf32>, vector<32x96xf32>, vector<8x96xf32> -> vector<8x96xf32>
    %c1_31 = arith.constant 1 : index
    %c0_32 = arith.constant 0 : index
    %58 = vector.load %arg4[%c1_31, %c0_32] : memref<2x96xf32, #tpu.memory_space<vmem>>, vector<1x96xf32>
    %59 = vector.broadcast %58 : vector<1x96xf32> to vector<8x96xf32>
    %60 = arith.addf %57, %59 : vector<8x96xf32>
    %61 = vector.extract_strided_slice %55 {offsets = [0, 0], sizes = [8, 64], strides = [1, 1]} : vector<8x96xf32> to vector<8x64xf32>
    %62 = vector.extract_strided_slice %60 {offsets = [0, 0], sizes = [8, 64], strides = [1, 1]} : vector<8x96xf32> to vector<8x64xf32>
    %63 = arith.addf %61, %62 : vector<8x64xf32>
    %64 = arith.negf %63 : vector<8x64xf32>
    %65 = math.exp %64 : vector<8x64xf32>
    %cst_33 = arith.constant 1.000000e+00 : f32
    %66 = vector.broadcast %cst_33 : f32 to vector<8x64xf32>
    %67 = arith.addf %66, %65 : vector<8x64xf32>
    %68 = arith.divf %66, %67 : vector<8x64xf32>
    %69 = vector.extract_strided_slice %68 {offsets = [0, 0], sizes = [8, 32], strides = [1, 1]} : vector<8x64xf32> to vector<8x32xf32>
    %70 = vector.extract_strided_slice %68 {offsets = [0, 32], sizes = [8, 32], strides = [1, 1]} : vector<8x64xf32> to vector<8x32xf32>
    %71 = vector.extract_strided_slice %55 {offsets = [0, 64], sizes = [8, 32], strides = [1, 1]} : vector<8x96xf32> to vector<8x32xf32>
    %72 = vector.extract_strided_slice %60 {offsets = [0, 64], sizes = [8, 32], strides = [1, 1]} : vector<8x96xf32> to vector<8x32xf32>
    %73 = arith.mulf %69, %72 : vector<8x32xf32>
    %74 = arith.addf %71, %73 : vector<8x32xf32>
    %75 = math.tanh %74 : vector<8x32xf32>
    %cst_34 = arith.constant 1.000000e+00 : f32
    %76 = vector.broadcast %cst_34 : f32 to vector<8x32xf32>
    %77 = arith.subf %76, %70 : vector<8x32xf32>
    %78 = arith.mulf %77, %75 : vector<8x32xf32>
    %79 = arith.mulf %70, %46 : vector<8x32xf32>
    %80 = arith.addf %78, %79 : vector<8x32xf32>
    %81 = arith.index_cast %c1_i32 : i32 to index
    %c0_35 = arith.constant 0 : index
    %c0_36 = arith.constant 0 : index
    %82 = vector.load %arg6[%81, %c0_35, %c0_36] : memref<8x32x256xf32, #tpu.memory_space<vmem>>, vector<1x32x256xf32>
    %83 = vector.shape_cast %82 : vector<1x32x256xf32> to vector<32x256xf32>
    %cst_37 = arith.constant dense<0.000000e+00> : vector<8x256xf32>
    %84 = tpu.matmul %80, %83, %cst_37 {dimension_numbers = #tpu.dot_dimension_numbers<[1], [0], [0], [1], [0, 0, 1, 1], [], []>} : vector<8x32xf32>, vector<32x256xf32>, vector<8x256xf32> -> vector<8x256xf32>
    %85 = arith.addf %51, %84 : vector<8x256xf32>
    %c2_i32 = arith.constant 2 : i32
    %c8_i32_38 = arith.constant 8 : i32
    %86 = arith.muli %c2_i32, %c8_i32_38 : i32
    %87 = tpu.assume_multiple %86, 8 : i32
    %88 = arith.index_cast %87 : i32 to index
    %c0_39 = arith.constant 0 : index
    %89 = vector.load %arg11[%88, %c0_39] : memref<64x96xf32, #tpu.memory_space<vmem>>, vector<8x96xf32>
    %c0_40 = arith.constant 0 : index
    %c0_41 = arith.constant 0 : index
    %90 = vector.load %arg5[%c0_40, %c0_41] : memref<32x96xf32, #tpu.memory_space<vmem>>, vector<32x96xf32>
    %cst_42 = arith.constant dense<0.000000e+00> : vector<8x96xf32>
    %91 = tpu.matmul %80, %90, %cst_42 {dimension_numbers = #tpu.dot_dimension_numbers<[1], [0], [0], [1], [0, 0, 1, 1], [], []>} : vector<8x32xf32>, vector<32x96xf32>, vector<8x96xf32> -> vector<8x96xf32>
    %c1_43 = arith.constant 1 : index
    %c0_44 = arith.constant 0 : index
    %92 = vector.load %arg4[%c1_43, %c0_44] : memref<2x96xf32, #tpu.memory_space<vmem>>, vector<1x96xf32>
    %93 = vector.broadcast %92 : vector<1x96xf32> to vector<8x96xf32>
    %94 = arith.addf %91, %93 : vector<8x96xf32>
    %95 = vector.extract_strided_slice %89 {offsets = [0, 0], sizes = [8, 64], strides = [1, 1]} : vector<8x96xf32> to vector<8x64xf32>
    %96 = vector.extract_strided_slice %94 {offsets = [0, 0], sizes = [8, 64], strides = [1, 1]} : vector<8x96xf32> to vector<8x64xf32>
    %97 = arith.addf %95, %96 : vector<8x64xf32>
    %98 = arith.negf %97 : vector<8x64xf32>
    %99 = math.exp %98 : vector<8x64xf32>
    %cst_45 = arith.constant 1.000000e+00 : f32
    %100 = vector.broadcast %cst_45 : f32 to vector<8x64xf32>
    %101 = arith.addf %100, %99 : vector<8x64xf32>
    %102 = arith.divf %100, %101 : vector<8x64xf32>
    %103 = vector.extract_strided_slice %102 {offsets = [0, 0], sizes = [8, 32], strides = [1, 1]} : vector<8x64xf32> to vector<8x32xf32>
    %104 = vector.extract_strided_slice %102 {offsets = [0, 32], sizes = [8, 32], strides = [1, 1]} : vector<8x64xf32> to vector<8x32xf32>
    %105 = vector.extract_strided_slice %89 {offsets = [0, 64], sizes = [8, 32], strides = [1, 1]} : vector<8x96xf32> to vector<8x32xf32>
    %106 = vector.extract_strided_slice %94 {offsets = [0, 64], sizes = [8, 32], strides = [1, 1]} : vector<8x96xf32> to vector<8x32xf32>
    %107 = arith.mulf %103, %106 : vector<8x32xf32>
    %108 = arith.addf %105, %107 : vector<8x32xf32>
    %109 = math.tanh %108 : vector<8x32xf32>
    %cst_46 = arith.constant 1.000000e+00 : f32
    %110 = vector.broadcast %cst_46 : f32 to vector<8x32xf32>
    %111 = arith.subf %110, %104 : vector<8x32xf32>
    %112 = arith.mulf %111, %109 : vector<8x32xf32>
    %113 = arith.mulf %104, %80 : vector<8x32xf32>
    %114 = arith.addf %112, %113 : vector<8x32xf32>
    %115 = arith.index_cast %c2_i32 : i32 to index
    %c0_47 = arith.constant 0 : index
    %c0_48 = arith.constant 0 : index
    %116 = vector.load %arg6[%115, %c0_47, %c0_48] : memref<8x32x256xf32, #tpu.memory_space<vmem>>, vector<1x32x256xf32>
    %117 = vector.shape_cast %116 : vector<1x32x256xf32> to vector<32x256xf32>
    %cst_49 = arith.constant dense<0.000000e+00> : vector<8x256xf32>
    %118 = tpu.matmul %114, %117, %cst_49 {dimension_numbers = #tpu.dot_dimension_numbers<[1], [0], [0], [1], [0, 0, 1, 1], [], []>} : vector<8x32xf32>, vector<32x256xf32>, vector<8x256xf32> -> vector<8x256xf32>
    %119 = arith.addf %85, %118 : vector<8x256xf32>
    %c3_i32 = arith.constant 3 : i32
    %c8_i32_50 = arith.constant 8 : i32
    %120 = arith.muli %c3_i32, %c8_i32_50 : i32
    %121 = tpu.assume_multiple %120, 8 : i32
    %122 = arith.index_cast %121 : i32 to index
    %c0_51 = arith.constant 0 : index
    %123 = vector.load %arg11[%122, %c0_51] : memref<64x96xf32, #tpu.memory_space<vmem>>, vector<8x96xf32>
    %c0_52 = arith.constant 0 : index
    %c0_53 = arith.constant 0 : index
    %124 = vector.load %arg5[%c0_52, %c0_53] : memref<32x96xf32, #tpu.memory_space<vmem>>, vector<32x96xf32>
    %cst_54 = arith.constant dense<0.000000e+00> : vector<8x96xf32>
    %125 = tpu.matmul %114, %124, %cst_54 {dimension_numbers = #tpu.dot_dimension_numbers<[1], [0], [0], [1], [0, 0, 1, 1], [], []>} : vector<8x32xf32>, vector<32x96xf32>, vector<8x96xf32> -> vector<8x96xf32>
    %c1_55 = arith.constant 1 : index
    %c0_56 = arith.constant 0 : index
    %126 = vector.load %arg4[%c1_55, %c0_56] : memref<2x96xf32, #tpu.memory_space<vmem>>, vector<1x96xf32>
    %127 = vector.broadcast %126 : vector<1x96xf32> to vector<8x96xf32>
    %128 = arith.addf %125, %127 : vector<8x96xf32>
    %129 = vector.extract_strided_slice %123 {offsets = [0, 0], sizes = [8, 64], strides = [1, 1]} : vector<8x96xf32> to vector<8x64xf32>
    %130 = vector.extract_strided_slice %128 {offsets = [0, 0], sizes = [8, 64], strides = [1, 1]} : vector<8x96xf32> to vector<8x64xf32>
    %131 = arith.addf %129, %130 : vector<8x64xf32>
    %132 = arith.negf %131 : vector<8x64xf32>
    %133 = math.exp %132 : vector<8x64xf32>
    %cst_57 = arith.constant 1.000000e+00 : f32
    %134 = vector.broadcast %cst_57 : f32 to vector<8x64xf32>
    %135 = arith.addf %134, %133 : vector<8x64xf32>
    %136 = arith.divf %134, %135 : vector<8x64xf32>
    %137 = vector.extract_strided_slice %136 {offsets = [0, 0], sizes = [8, 32], strides = [1, 1]} : vector<8x64xf32> to vector<8x32xf32>
    %138 = vector.extract_strided_slice %136 {offsets = [0, 32], sizes = [8, 32], strides = [1, 1]} : vector<8x64xf32> to vector<8x32xf32>
    %139 = vector.extract_strided_slice %123 {offsets = [0, 64], sizes = [8, 32], strides = [1, 1]} : vector<8x96xf32> to vector<8x32xf32>
    %140 = vector.extract_strided_slice %128 {offsets = [0, 64], sizes = [8, 32], strides = [1, 1]} : vector<8x96xf32> to vector<8x32xf32>
    %141 = arith.mulf %137, %140 : vector<8x32xf32>
    %142 = arith.addf %139, %141 : vector<8x32xf32>
    %143 = math.tanh %142 : vector<8x32xf32>
    %cst_58 = arith.constant 1.000000e+00 : f32
    %144 = vector.broadcast %cst_58 : f32 to vector<8x32xf32>
    %145 = arith.subf %144, %138 : vector<8x32xf32>
    %146 = arith.mulf %145, %143 : vector<8x32xf32>
    %147 = arith.mulf %138, %114 : vector<8x32xf32>
    %148 = arith.addf %146, %147 : vector<8x32xf32>
    %149 = arith.index_cast %c3_i32 : i32 to index
    %c0_59 = arith.constant 0 : index
    %c0_60 = arith.constant 0 : index
    %150 = vector.load %arg6[%149, %c0_59, %c0_60] : memref<8x32x256xf32, #tpu.memory_space<vmem>>, vector<1x32x256xf32>
    %151 = vector.shape_cast %150 : vector<1x32x256xf32> to vector<32x256xf32>
    %cst_61 = arith.constant dense<0.000000e+00> : vector<8x256xf32>
    %152 = tpu.matmul %148, %151, %cst_61 {dimension_numbers = #tpu.dot_dimension_numbers<[1], [0], [0], [1], [0, 0, 1, 1], [], []>} : vector<8x32xf32>, vector<32x256xf32>, vector<8x256xf32> -> vector<8x256xf32>
    %153 = arith.addf %119, %152 : vector<8x256xf32>
    %c4_i32 = arith.constant 4 : i32
    %c8_i32_62 = arith.constant 8 : i32
    %154 = arith.muli %c4_i32, %c8_i32_62 : i32
    %155 = tpu.assume_multiple %154, 8 : i32
    %156 = arith.index_cast %155 : i32 to index
    %c0_63 = arith.constant 0 : index
    %157 = vector.load %arg11[%156, %c0_63] : memref<64x96xf32, #tpu.memory_space<vmem>>, vector<8x96xf32>
    %c0_64 = arith.constant 0 : index
    %c0_65 = arith.constant 0 : index
    %158 = vector.load %arg5[%c0_64, %c0_65] : memref<32x96xf32, #tpu.memory_space<vmem>>, vector<32x96xf32>
    %cst_66 = arith.constant dense<0.000000e+00> : vector<8x96xf32>
    %159 = tpu.matmul %148, %158, %cst_66 {dimension_numbers = #tpu.dot_dimension_numbers<[1], [0], [0], [1], [0, 0, 1, 1], [], []>} : vector<8x32xf32>, vector<32x96xf32>, vector<8x96xf32> -> vector<8x96xf32>
    %c1_67 = arith.constant 1 : index
    %c0_68 = arith.constant 0 : index
    %160 = vector.load %arg4[%c1_67, %c0_68] : memref<2x96xf32, #tpu.memory_space<vmem>>, vector<1x96xf32>
    %161 = vector.broadcast %160 : vector<1x96xf32> to vector<8x96xf32>
    %162 = arith.addf %159, %161 : vector<8x96xf32>
    %163 = vector.extract_strided_slice %157 {offsets = [0, 0], sizes = [8, 64], strides = [1, 1]} : vector<8x96xf32> to vector<8x64xf32>
    %164 = vector.extract_strided_slice %162 {offsets = [0, 0], sizes = [8, 64], strides = [1, 1]} : vector<8x96xf32> to vector<8x64xf32>
    %165 = arith.addf %163, %164 : vector<8x64xf32>
    %166 = arith.negf %165 : vector<8x64xf32>
    %167 = math.exp %166 : vector<8x64xf32>
    %cst_69 = arith.constant 1.000000e+00 : f32
    %168 = vector.broadcast %cst_69 : f32 to vector<8x64xf32>
    %169 = arith.addf %168, %167 : vector<8x64xf32>
    %170 = arith.divf %168, %169 : vector<8x64xf32>
    %171 = vector.extract_strided_slice %170 {offsets = [0, 0], sizes = [8, 32], strides = [1, 1]} : vector<8x64xf32> to vector<8x32xf32>
    %172 = vector.extract_strided_slice %170 {offsets = [0, 32], sizes = [8, 32], strides = [1, 1]} : vector<8x64xf32> to vector<8x32xf32>
    %173 = vector.extract_strided_slice %157 {offsets = [0, 64], sizes = [8, 32], strides = [1, 1]} : vector<8x96xf32> to vector<8x32xf32>
    %174 = vector.extract_strided_slice %162 {offsets = [0, 64], sizes = [8, 32], strides = [1, 1]} : vector<8x96xf32> to vector<8x32xf32>
    %175 = arith.mulf %171, %174 : vector<8x32xf32>
    %176 = arith.addf %173, %175 : vector<8x32xf32>
    %177 = math.tanh %176 : vector<8x32xf32>
    %cst_70 = arith.constant 1.000000e+00 : f32
    %178 = vector.broadcast %cst_70 : f32 to vector<8x32xf32>
    %179 = arith.subf %178, %172 : vector<8x32xf32>
    %180 = arith.mulf %179, %177 : vector<8x32xf32>
    %181 = arith.mulf %172, %148 : vector<8x32xf32>
    %182 = arith.addf %180, %181 : vector<8x32xf32>
    %183 = arith.index_cast %c4_i32 : i32 to index
    %c0_71 = arith.constant 0 : index
    %c0_72 = arith.constant 0 : index
    %184 = vector.load %arg6[%183, %c0_71, %c0_72] : memref<8x32x256xf32, #tpu.memory_space<vmem>>, vector<1x32x256xf32>
    %185 = vector.shape_cast %184 : vector<1x32x256xf32> to vector<32x256xf32>
    %cst_73 = arith.constant dense<0.000000e+00> : vector<8x256xf32>
    %186 = tpu.matmul %182, %185, %cst_73 {dimension_numbers = #tpu.dot_dimension_numbers<[1], [0], [0], [1], [0, 0, 1, 1], [], []>} : vector<8x32xf32>, vector<32x256xf32>, vector<8x256xf32> -> vector<8x256xf32>
    %187 = arith.addf %153, %186 : vector<8x256xf32>
    %c5_i32 = arith.constant 5 : i32
    %c8_i32_74 = arith.constant 8 : i32
    %188 = arith.muli %c5_i32, %c8_i32_74 : i32
    %189 = tpu.assume_multiple %188, 8 : i32
    %190 = arith.index_cast %189 : i32 to index
    %c0_75 = arith.constant 0 : index
    %191 = vector.load %arg11[%190, %c0_75] : memref<64x96xf32, #tpu.memory_space<vmem>>, vector<8x96xf32>
    %c0_76 = arith.constant 0 : index
    %c0_77 = arith.constant 0 : index
    %192 = vector.load %arg5[%c0_76, %c0_77] : memref<32x96xf32, #tpu.memory_space<vmem>>, vector<32x96xf32>
    %cst_78 = arith.constant dense<0.000000e+00> : vector<8x96xf32>
    %193 = tpu.matmul %182, %192, %cst_78 {dimension_numbers = #tpu.dot_dimension_numbers<[1], [0], [0], [1], [0, 0, 1, 1], [], []>} : vector<8x32xf32>, vector<32x96xf32>, vector<8x96xf32> -> vector<8x96xf32>
    %c1_79 = arith.constant 1 : index
    %c0_80 = arith.constant 0 : index
    %194 = vector.load %arg4[%c1_79, %c0_80] : memref<2x96xf32, #tpu.memory_space<vmem>>, vector<1x96xf32>
    %195 = vector.broadcast %194 : vector<1x96xf32> to vector<8x96xf32>
    %196 = arith.addf %193, %195 : vector<8x96xf32>
    %197 = vector.extract_strided_slice %191 {offsets = [0, 0], sizes = [8, 64], strides = [1, 1]} : vector<8x96xf32> to vector<8x64xf32>
    %198 = vector.extract_strided_slice %196 {offsets = [0, 0], sizes = [8, 64], strides = [1, 1]} : vector<8x96xf32> to vector<8x64xf32>
    %199 = arith.addf %197, %198 : vector<8x64xf32>
    %200 = arith.negf %199 : vector<8x64xf32>
    %201 = math.exp %200 : vector<8x64xf32>
    %cst_81 = arith.constant 1.000000e+00 : f32
    %202 = vector.broadcast %cst_81 : f32 to vector<8x64xf32>
    %203 = arith.addf %202, %201 : vector<8x64xf32>
    %204 = arith.divf %202, %203 : vector<8x64xf32>
    %205 = vector.extract_strided_slice %204 {offsets = [0, 0], sizes = [8, 32], strides = [1, 1]} : vector<8x64xf32> to vector<8x32xf32>
    %206 = vector.extract_strided_slice %204 {offsets = [0, 32], sizes = [8, 32], strides = [1, 1]} : vector<8x64xf32> to vector<8x32xf32>
    %207 = vector.extract_strided_slice %191 {offsets = [0, 64], sizes = [8, 32], strides = [1, 1]} : vector<8x96xf32> to vector<8x32xf32>
    %208 = vector.extract_strided_slice %196 {offsets = [0, 64], sizes = [8, 32], strides = [1, 1]} : vector<8x96xf32> to vector<8x32xf32>
    %209 = arith.mulf %205, %208 : vector<8x32xf32>
    %210 = arith.addf %207, %209 : vector<8x32xf32>
    %211 = math.tanh %210 : vector<8x32xf32>
    %cst_82 = arith.constant 1.000000e+00 : f32
    %212 = vector.broadcast %cst_82 : f32 to vector<8x32xf32>
    %213 = arith.subf %212, %206 : vector<8x32xf32>
    %214 = arith.mulf %213, %211 : vector<8x32xf32>
    %215 = arith.mulf %206, %182 : vector<8x32xf32>
    %216 = arith.addf %214, %215 : vector<8x32xf32>
    %217 = arith.index_cast %c5_i32 : i32 to index
    %c0_83 = arith.constant 0 : index
    %c0_84 = arith.constant 0 : index
    %218 = vector.load %arg6[%217, %c0_83, %c0_84] : memref<8x32x256xf32, #tpu.memory_space<vmem>>, vector<1x32x256xf32>
    %219 = vector.shape_cast %218 : vector<1x32x256xf32> to vector<32x256xf32>
    %cst_85 = arith.constant dense<0.000000e+00> : vector<8x256xf32>
    %220 = tpu.matmul %216, %219, %cst_85 {dimension_numbers = #tpu.dot_dimension_numbers<[1], [0], [0], [1], [0, 0, 1, 1], [], []>} : vector<8x32xf32>, vector<32x256xf32>, vector<8x256xf32> -> vector<8x256xf32>
    %221 = arith.addf %187, %220 : vector<8x256xf32>
    %c6_i32 = arith.constant 6 : i32
    %c8_i32_86 = arith.constant 8 : i32
    %222 = arith.muli %c6_i32, %c8_i32_86 : i32
    %223 = tpu.assume_multiple %222, 8 : i32
    %224 = arith.index_cast %223 : i32 to index
    %c0_87 = arith.constant 0 : index
    %225 = vector.load %arg11[%224, %c0_87] : memref<64x96xf32, #tpu.memory_space<vmem>>, vector<8x96xf32>
    %c0_88 = arith.constant 0 : index
    %c0_89 = arith.constant 0 : index
    %226 = vector.load %arg5[%c0_88, %c0_89] : memref<32x96xf32, #tpu.memory_space<vmem>>, vector<32x96xf32>
    %cst_90 = arith.constant dense<0.000000e+00> : vector<8x96xf32>
    %227 = tpu.matmul %216, %226, %cst_90 {dimension_numbers = #tpu.dot_dimension_numbers<[1], [0], [0], [1], [0, 0, 1, 1], [], []>} : vector<8x32xf32>, vector<32x96xf32>, vector<8x96xf32> -> vector<8x96xf32>
    %c1_91 = arith.constant 1 : index
    %c0_92 = arith.constant 0 : index
    %228 = vector.load %arg4[%c1_91, %c0_92] : memref<2x96xf32, #tpu.memory_space<vmem>>, vector<1x96xf32>
    %229 = vector.broadcast %228 : vector<1x96xf32> to vector<8x96xf32>
    %230 = arith.addf %227, %229 : vector<8x96xf32>
    %231 = vector.extract_strided_slice %225 {offsets = [0, 0], sizes = [8, 64], strides = [1, 1]} : vector<8x96xf32> to vector<8x64xf32>
    %232 = vector.extract_strided_slice %230 {offsets = [0, 0], sizes = [8, 64], strides = [1, 1]} : vector<8x96xf32> to vector<8x64xf32>
    %233 = arith.addf %231, %232 : vector<8x64xf32>
    %234 = arith.negf %233 : vector<8x64xf32>
    %235 = math.exp %234 : vector<8x64xf32>
    %cst_93 = arith.constant 1.000000e+00 : f32
    %236 = vector.broadcast %cst_93 : f32 to vector<8x64xf32>
    %237 = arith.addf %236, %235 : vector<8x64xf32>
    %238 = arith.divf %236, %237 : vector<8x64xf32>
    %239 = vector.extract_strided_slice %238 {offsets = [0, 0], sizes = [8, 32], strides = [1, 1]} : vector<8x64xf32> to vector<8x32xf32>
    %240 = vector.extract_strided_slice %238 {offsets = [0, 32], sizes = [8, 32], strides = [1, 1]} : vector<8x64xf32> to vector<8x32xf32>
    %241 = vector.extract_strided_slice %225 {offsets = [0, 64], sizes = [8, 32], strides = [1, 1]} : vector<8x96xf32> to vector<8x32xf32>
    %242 = vector.extract_strided_slice %230 {offsets = [0, 64], sizes = [8, 32], strides = [1, 1]} : vector<8x96xf32> to vector<8x32xf32>
    %243 = arith.mulf %239, %242 : vector<8x32xf32>
    %244 = arith.addf %241, %243 : vector<8x32xf32>
    %245 = math.tanh %244 : vector<8x32xf32>
    %cst_94 = arith.constant 1.000000e+00 : f32
    %246 = vector.broadcast %cst_94 : f32 to vector<8x32xf32>
    %247 = arith.subf %246, %240 : vector<8x32xf32>
    %248 = arith.mulf %247, %245 : vector<8x32xf32>
    %249 = arith.mulf %240, %216 : vector<8x32xf32>
    %250 = arith.addf %248, %249 : vector<8x32xf32>
    %251 = arith.index_cast %c6_i32 : i32 to index
    %c0_95 = arith.constant 0 : index
    %c0_96 = arith.constant 0 : index
    %252 = vector.load %arg6[%251, %c0_95, %c0_96] : memref<8x32x256xf32, #tpu.memory_space<vmem>>, vector<1x32x256xf32>
    %253 = vector.shape_cast %252 : vector<1x32x256xf32> to vector<32x256xf32>
    %cst_97 = arith.constant dense<0.000000e+00> : vector<8x256xf32>
    %254 = tpu.matmul %250, %253, %cst_97 {dimension_numbers = #tpu.dot_dimension_numbers<[1], [0], [0], [1], [0, 0, 1, 1], [], []>} : vector<8x32xf32>, vector<32x256xf32>, vector<8x256xf32> -> vector<8x256xf32>
    %255 = arith.addf %221, %254 : vector<8x256xf32>
    %c7_i32 = arith.constant 7 : i32
    %c8_i32_98 = arith.constant 8 : i32
    %256 = arith.muli %c7_i32, %c8_i32_98 : i32
    %257 = tpu.assume_multiple %256, 8 : i32
    %258 = arith.index_cast %257 : i32 to index
    %c0_99 = arith.constant 0 : index
    %259 = vector.load %arg11[%258, %c0_99] : memref<64x96xf32, #tpu.memory_space<vmem>>, vector<8x96xf32>
    %c0_100 = arith.constant 0 : index
    %c0_101 = arith.constant 0 : index
    %260 = vector.load %arg5[%c0_100, %c0_101] : memref<32x96xf32, #tpu.memory_space<vmem>>, vector<32x96xf32>
    %cst_102 = arith.constant dense<0.000000e+00> : vector<8x96xf32>
    %261 = tpu.matmul %250, %260, %cst_102 {dimension_numbers = #tpu.dot_dimension_numbers<[1], [0], [0], [1], [0, 0, 1, 1], [], []>} : vector<8x32xf32>, vector<32x96xf32>, vector<8x96xf32> -> vector<8x96xf32>
    %c1_103 = arith.constant 1 : index
    %c0_104 = arith.constant 0 : index
    %262 = vector.load %arg4[%c1_103, %c0_104] : memref<2x96xf32, #tpu.memory_space<vmem>>, vector<1x96xf32>
    %263 = vector.broadcast %262 : vector<1x96xf32> to vector<8x96xf32>
    %264 = arith.addf %261, %263 : vector<8x96xf32>
    %265 = vector.extract_strided_slice %259 {offsets = [0, 0], sizes = [8, 64], strides = [1, 1]} : vector<8x96xf32> to vector<8x64xf32>
    %266 = vector.extract_strided_slice %264 {offsets = [0, 0], sizes = [8, 64], strides = [1, 1]} : vector<8x96xf32> to vector<8x64xf32>
    %267 = arith.addf %265, %266 : vector<8x64xf32>
    %268 = arith.negf %267 : vector<8x64xf32>
    %269 = math.exp %268 : vector<8x64xf32>
    %cst_105 = arith.constant 1.000000e+00 : f32
    %270 = vector.broadcast %cst_105 : f32 to vector<8x64xf32>
    %271 = arith.addf %270, %269 : vector<8x64xf32>
    %272 = arith.divf %270, %271 : vector<8x64xf32>
    %273 = vector.extract_strided_slice %272 {offsets = [0, 0], sizes = [8, 32], strides = [1, 1]} : vector<8x64xf32> to vector<8x32xf32>
    %274 = vector.extract_strided_slice %272 {offsets = [0, 32], sizes = [8, 32], strides = [1, 1]} : vector<8x64xf32> to vector<8x32xf32>
    %275 = vector.extract_strided_slice %259 {offsets = [0, 64], sizes = [8, 32], strides = [1, 1]} : vector<8x96xf32> to vector<8x32xf32>
    %276 = vector.extract_strided_slice %264 {offsets = [0, 64], sizes = [8, 32], strides = [1, 1]} : vector<8x96xf32> to vector<8x32xf32>
    %277 = arith.mulf %273, %276 : vector<8x32xf32>
    %278 = arith.addf %275, %277 : vector<8x32xf32>
    %279 = math.tanh %278 : vector<8x32xf32>
    %cst_106 = arith.constant 1.000000e+00 : f32
    %280 = vector.broadcast %cst_106 : f32 to vector<8x32xf32>
    %281 = arith.subf %280, %274 : vector<8x32xf32>
    %282 = arith.mulf %281, %279 : vector<8x32xf32>
    %283 = arith.mulf %274, %250 : vector<8x32xf32>
    %284 = arith.addf %282, %283 : vector<8x32xf32>
    %285 = arith.index_cast %c7_i32 : i32 to index
    %c0_107 = arith.constant 0 : index
    %c0_108 = arith.constant 0 : index
    %286 = vector.load %arg6[%285, %c0_107, %c0_108] : memref<8x32x256xf32, #tpu.memory_space<vmem>>, vector<1x32x256xf32>
    %287 = vector.shape_cast %286 : vector<1x32x256xf32> to vector<32x256xf32>
    %cst_109 = arith.constant dense<0.000000e+00> : vector<8x256xf32>
    %288 = tpu.matmul %284, %287, %cst_109 {dimension_numbers = #tpu.dot_dimension_numbers<[1], [0], [0], [1], [0, 0, 1, 1], [], []>} : vector<8x32xf32>, vector<32x256xf32>, vector<8x256xf32> -> vector<8x256xf32>
    %289 = arith.addf %255, %288 : vector<8x256xf32>
    %c8_i32_110 = arith.constant 8 : i32
    %cst_111 = arith.constant 0.000000e+00 : f32
    %290 = vector.broadcast %cst_111 : f32 to vector<8x256xf32>
    %291 = arith.maximumf %289, %290 : vector<8x256xf32>
    %c0_112 = arith.constant 0 : index
    %c0_113 = arith.constant 0 : index
    %292 = vector.load %arg8[%c0_112, %c0_113] : memref<256x128xf32, #tpu.memory_space<vmem>>, vector<256x128xf32>
    %cst_114 = arith.constant dense<0.000000e+00> : vector<8x128xf32>
    %293 = tpu.matmul %291, %292, %cst_114 {dimension_numbers = #tpu.dot_dimension_numbers<[1], [0], [0], [1], [0, 0, 1, 1], [], []>} : vector<8x256xf32>, vector<256x128xf32>, vector<8x128xf32> -> vector<8x128xf32>
    %c0_115 = arith.constant 0 : index
    %c0_116 = arith.constant 0 : index
    %294 = vector.load %arg9[%c0_115, %c0_116] : memref<1x128xf32, #tpu.memory_space<vmem>>, vector<1x128xf32>
    %295 = vector.broadcast %294 : vector<1x128xf32> to vector<8x128xf32>
    %296 = arith.addf %293, %295 : vector<8x128xf32>
    %cst_117 = arith.constant 0.000000e+00 : f32
    %297 = vector.broadcast %cst_117 : f32 to vector<8x128xf32>
    %298 = arith.maximumf %296, %297 : vector<8x128xf32>
    %299 = tpu.iota {dimensions = array<i32: 1>} : vector<1x128xi32>
    %c5_i32_118 = arith.constant 5 : i32
    %300 = vector.broadcast %c5_i32_118 : i32 to vector<1x128xi32>
    %301 = arith.cmpi slt, %299, %300 : vector<1x128xi32>
    %cst_119 = arith.constant -1.000000e+30 : f32
    %302 = vector.shape_cast %301 : vector<1x128xi1> to vector<1x128xi1>
    %303 = vector.broadcast %302 : vector<1x128xi1> to vector<8x128xi1>
    %304 = vector.broadcast %cst_119 : f32 to vector<8x128xf32>
    %305 = arith.select %303, %298, %304 : vector<8x128xi1>, vector<8x128xf32>
    %cst_120 = arith.constant dense<0xFF800000> : vector<8xf32>
    %306 = vector.multi_reduction <maximumf>, %305, %cst_120 [1] : vector<8x128xf32> to vector<8xf32>
    %307 = vector.shape_cast %306 : vector<8xf32> to vector<8x1xf32>
    %308 = vector.broadcast %307 : vector<8x1xf32> to vector<8x128xf32>
    %309 = arith.subf %305, %308 : vector<8x128xf32>
    %310 = math.exp %309 : vector<8x128xf32>
    %cst_121 = arith.constant dense<0.000000e+00> : vector<8xf32>
    %311 = vector.multi_reduction <add>, %310, %cst_121 [1] : vector<8x128xf32> to vector<8xf32>
    %312 = vector.shape_cast %311 : vector<8xf32> to vector<8x1xf32>
    %313 = math.log %312 : vector<8x1xf32>
    %314 = arith.addf %313, %307 : vector<8x1xf32>
    %315 = vector.broadcast %314 : vector<8x1xf32> to vector<8x128xf32>
    %316 = arith.subf %305, %315 : vector<8x128xf32>
    %c0_122 = arith.constant 0 : index
    %c0_123 = arith.constant 0 : index
    %317 = vector.load %arg10[%c0_122, %c0_123] : memref<8x128xf32, #tpu.memory_space<vmem>>, vector<8x128xf32>
    tpu.vector_store %arg10[%c0_122, %c0_123], %316 {strides = array<i32>} : memref<8x128xf32, #tpu.memory_space<vmem>>, vector<8x128xf32>,
    return
  }
}

</mosaic_0001>

<llo_original>
// kernel: rnnbase_forward.1
$region0: #{rnnbase_forward.1}
  #allocation0 [shape = 'u32[]', space=smem, size = 0x4, offset = 0x4, fixed_abs, tag = 'smem constant byte address 0x4 - core index']
  #allocation1 [shape = 'u32[144,128]{1,0:T(1,128)}', space=vmem, size = 0x12000, scoped, tag = 'internal scratch']
  #allocation2 [shape = 'f32[64,96]{1,0:T(8,128)}', space=vmem, size = 0x8000, scoped, tag = 'scratch operand']
  %s0 = inlined_call_operand.vmem [shape: f32[64,16], index: 0, kind: input, shape index: {}]
  %s1 = inlined_call_operand.vmem [shape: f32[16,32], index: 1, kind: input, shape index: {}]
  %s2 = inlined_call_operand.vmem [shape: f32[1,32], index: 2, kind: input, shape index: {}]
  %s3 = inlined_call_operand.vmem [shape: f32[32,96], index: 3, kind: input, shape index: {}]
  %s4 = inlined_call_operand.vmem [shape: f32[2,96], index: 4, kind: input, shape index: {}]
  %s5 = inlined_call_operand.vmem [shape: f32[32,96], index: 5, kind: input, shape index: {}]
  %s6 = inlined_call_operand.hbm [shape: f32[8,32,256], index: 6, kind: input, shape index: {}]
  %s7 = inlined_call_operand.vmem [shape: f32[1,256], index: 7, kind: input, shape index: {}]
  %s8 = inlined_call_operand.hbm [shape: f32[256,128], index: 8, kind: input, shape index: {}]
  %s9 = inlined_call_operand.vmem [shape: f32[1,128], index: 9, kind: input, shape index: {}]
  %s10 = inlined_call_operand.vmem [shape: f32[8,128], index: 10, kind: output, shape index: {}]
  %s11 = sld [smem:[#allocation0]]
  $region58: #{rnnbase_forward.1} parent=0
    _
  %s13 = ssub.s32 1, %s11
  %s14 = scalar_select 0, %s13, %s11
  $region1: #{rnnbase_forward.1} parent=0
    #allocation3 [shape = 'u8[262144]{0}', space=vmem, size = 0x40000, scoped, tag = 'input window, operand 6, single buffered']
    #allocation4 [shape = 's32[1]{0}', space=sflag, size = 0x4, scoped, tag = 'scoped memory for rnnbase_forward.1']
    #allocation5 [shape = 'u8[131072]{0}', space=vmem, size = 0x20000, scoped, tag = 'input window, operand 8, single buffered']
    #allocation6 [shape = 's32[1]{0}', space=sflag, size = 0x4, scoped, tag = 'scoped memory for rnnbase_forward.1']
    %15 = vsyncpa [#allocation4], 0
    %16 = vsyncpa [#allocation6], 0
    // Predicated region
    $region2: #{rnnbase_forward.1} parent=1 // pred_check
      _
    $region3: #{rnnbase_forward.1} parent=1 // pred_check_branch
      %18 = sbr.rel (0) target = $region5
    $region4: #{rnnbase_forward.1} parent=1 // pred_region
      _
    $region5: #{rnnbase_forward.1} parent=1 // pred_fallthru
      _
    // Predicated region
    $region6: #{rnnbase_forward.1} parent=1 // pred_check
      _
    $region7: #{rnnbase_forward.1} parent=1 // pred_check_branch
      %20 = sbr.rel (0) target = $region9
    $region8: #{rnnbase_forward.1} parent=1 // pred_region
      _
    $region9: #{rnnbase_forward.1} parent=1 // pred_fallthru
      _
    // Predicated region
    $region10: #{rnnbase_forward.1} parent=1 // pred_check
      _
    $region11: #{rnnbase_forward.1} parent=1 // pred_check_branch
      %22 = sbr.rel (0) target = $region13
    $region12: #{rnnbase_forward.1} parent=1 // pred_region
      _
    $region13: #{rnnbase_forward.1} parent=1 // pred_fallthru
      _
    // Predicated region
    $region14: #{rnnbase_forward.1} parent=1 // pred_check
      _
    $region15: #{rnnbase_forward.1} parent=1 // pred_check_branch
      %24 = sbr.rel (0) target = $region17
    $region16: #{rnnbase_forward.1} parent=1 // pred_region
      _
    $region17: #{rnnbase_forward.1} parent=1 // pred_fallthru
      _
    // Predicated region
    $region18: #{rnnbase_forward.1} parent=1 // pred_check
      _
    $region19: #{rnnbase_forward.1} parent=1 // pred_check_branch
      %26 = sbr.rel (0) target = $region21
    $region20: #{rnnbase_forward.1} parent=1 // pred_region
      _
    $region21: #{rnnbase_forward.1} parent=1 // pred_fallthru
      _
    // Predicated region
    $region22: #{rnnbase_forward.1} parent=1 // pred_check
      _
    $region23: #{rnnbase_forward.1} parent=1 // pred_check_branch
      %28 = sbr.rel (0) target = $region25
    $region24: #{rnnbase_forward.1} parent=1 // pred_region
      _
    $region25: #{rnnbase_forward.1} parent=1 // pred_fallthru
      _
    // Predicated region
    $region26: #{rnnbase_forward.1} parent=1 // pred_check
      _
    $region27: #{rnnbase_forward.1} parent=1 // pred_check_branch
      %30 = sbr.rel (0) target = $region29
    $region28: #{rnnbase_forward.1} parent=1 // pred_region
      %s32 = ssub.s32 8192, 8192
      %33 = vsyncadd [#allocation4], %s32
      %s34 = sshll.u32 [#allocation3], 4
      %s35 = int_to_ptr.vmem [resolvable:$true] %s34
      %40 = dma.hbm_to_vmem [thread:$0]  %s6, 8192, %s35, [#allocation4], 256, 256, 16
    $region29: #{rnnbase_forward.1} parent=1 // pred_fallthru
      _
    // Predicated region
    $region30: #{rnnbase_forward.1} parent=1 // pred_check
      _
    $region31: #{rnnbase_forward.1} parent=1 // pred_check_branch
      %42 = sbr.rel (0) target = $region33
    $region32: #{rnnbase_forward.1} parent=1 // pred_region
      _
    $region33: #{rnnbase_forward.1} parent=1 // pred_fallthru
      _
    // Predicated region
    $region34: #{rnnbase_forward.1} parent=1 // pred_check
      _
    $region35: #{rnnbase_forward.1} parent=1 // pred_check_branch
      %44 = sbr.rel (0) target = $region37
    $region36: #{rnnbase_forward.1} parent=1 // pred_region
      %s46 = ssub.s32 4096, 4096
      %47 = vsyncadd [#allocation6], %s46
      %s48 = sshll.u32 [#allocation5], 4
      %s49 = int_to_ptr.vmem [resolvable:$true] %s48
      %54 = dma.hbm_to_vmem [thread:$0]  %s8, 4096, %s49, [#allocation6], 128, 128, 8
    $region37: #{rnnbase_forward.1} parent=1 // pred_fallthru
      _
    // Predicated region
    $region38: #{rnnbase_forward.1} parent=1 // pred_check
      _
    $region39: #{rnnbase_forward.1} parent=1 // pred_check_branch
      %56 = sbr.rel (0) target = $region41
    $region40: #{rnnbase_forward.1} parent=1 // pred_region
      _
    $region41: #{rnnbase_forward.1} parent=1 // pred_fallthru
      _
    // Predicated region
    $region42: #{rnnbase_forward.1} parent=1 // pred_check
      _
    $region43: #{rnnbase_forward.1} parent=1 // pred_check_branch
      %58 = sbr.rel (0) target = $region45
    $region44: #{rnnbase_forward.1} parent=1 // pred_region
      %59 = dma.done [#allocation4], 8192
    $region45: #{rnnbase_forward.1} parent=1 // pred_fallthru
      _
    // Predicated region
    $region46: #{rnnbase_forward.1} parent=1 // pred_check
      _
    $region47: #{rnnbase_forward.1} parent=1 // pred_check_branch
      %61 = sbr.rel (0) target = $region49
    $region48: #{rnnbase_forward.1} parent=1 // pred_region
      %62 = dma.done [#allocation6], 4096
    $region49: #{rnnbase_forward.1} parent=1 // pred_fallthru
      _
    %v63 = vld [vmem:[%s0] sm:$0xff]
    %v64 = vld [vmem:[%s0 + $0x8] sm:$0xff]
    %v65 = vld [vmem:[%s0 + $0x10] sm:$0xff]
    %v66 = vld [vmem:[%s0 + $0x18] sm:$0xff]
    %v67 = vld [vmem:[%s0 + $0x20] sm:$0xff]
    %v68 = vld [vmem:[%s0 + $0x28] sm:$0xff]
    %v69 = vld [vmem:[%s0 + $0x30] sm:$0xff]
    %v70 = vld [vmem:[%s0 + $0x38] sm:$0xff]
    %v71 = vld [vmem:[%s1] sm:$0xff]
    %v72 = vld [vmem:[%s1 + $0x8] sm:$0xff]
    %v73 = vld [vmem:[%s2] sm:$0x1]
    %v75 = vlaneseq
    %v76 = vshrl.u32 %v75, 7
    %v77 = vsub.s32 0, %v76
    %v78 = vrot.slane %v73, %v77
    %vm80 = vcmask 130048
    %v82 = vsel %vm80, %v63, 0
    %v85 = vsel %vm80, %v64, 0
    %v88 = vsel %vm80, %v65, 0
    %v91 = vsel %vm80, %v66, 0
    %v94 = vsel %vm80, %v67, 0
    %v97 = vsel %vm80, %v68, 0
    %v100 = vsel %vm80, %v69, 0
    %v103 = vsel %vm80, %v70, 0
    %105 = vmatprep.subr.mxu0 0.0
    %106 = vmatpush1.msra.mxu0 0.0
    %107 = vmatprep.subr.mxu0 0.0
    %108 = vmatpush1.msra.mxu0 0.0
    %109 = vmatprep.subr.mxu0 0.0
    %110 = vmatpush1.msra.mxu0 0.0
    %111 = vmatprep.subr.mxu0 0.0
    %112 = vmatpush1.msra.mxu0 0.0
    %113 = vmatprep.subr.mxu0 0.0
    %114 = vmatpush1.msra.mxu0 0.0
    %115 = vmatprep.subr.mxu0 0.0
    %116 = vmatpush1.msra.mxu0 0.0
    %117 = vmatprep.subr.mxu0 0.0
    %118 = vmatpush1.msra.mxu0 0.0
    %119 = vmatprep.subr.mxu0 0.0
    %120 = vmatpush1.msra.mxu0 0.0
    %121 = vmatprep.subr.mxu0 0.0
    %122 = vmatpush1.msra.mxu0 0.0
    %123 = vmatprep.subr.mxu0 0.0
    %124 = vmatpush1.msra.mxu0 0.0
    %125 = vmatprep.subr.mxu0 0.0
    %126 = vmatpush1.msra.mxu0 0.0
    %127 = vmatprep.subr.mxu0 0.0
    %128 = vmatpush1.msra.mxu0 0.0
    %129 = vmatprep.subr.mxu0 0.0
    %130 = vmatpush1.msra.mxu0 0.0
    %131 = vmatprep.subr.mxu0 0.0
    %132 = vmatpush1.msra.mxu0 0.0
    %133 = vmatprep.subr.mxu0 0.0
    %134 = vmatpush1.msra.mxu0 %v72
    %135 = vmatprep.subr.mxu0 0.0
    %136 = vmatpush1.msra.mxu0 %v71
    %137 = vmatprep.subr.mxu0 0.0
    %138 = vmatpush2.msra.mxu0 0.0
    %139 = vmatprep.subr.mxu0 0.0
    %140 = vmatpush2.msra.mxu0 0.0
    %141 = vmatprep.subr.mxu0 0.0
    %142 = vmatpush2.msra.mxu0 0.0
    %143 = vmatprep.subr.mxu0 0.0
    %144 = vmatpush2.msra.mxu0 0.0
    %145 = vmatprep.subr.mxu0 0.0
    %146 = vmatpush2.msra.mxu0 0.0
    %147 = vmatprep.subr.mxu0 0.0
    %148 = vmatpush2.msra.mxu0 0.0
    %149 = vmatprep.subr.mxu0 0.0
    %150 = vmatpush2.msra.mxu0 0.0
    %151 = vmatprep.subr.mxu0 0.0
    %152 = vmatpush2.msra.mxu0 0.0
    %153 = vmatprep.subr.mxu0 0.0
    %154 = vmatpush2.msra.mxu0 0.0
    %155 = vmatprep.subr.mxu0 0.0
    %156 = vmatpush2.msra.mxu0 0.0
    %157 = vmatprep.subr.mxu0 0.0
    %158 = vmatpush2.msra.mxu0 0.0
    %159 = vmatprep.subr.mxu0 0.0
    %160 = vmatpush2.msra.mxu0 0.0
    %161 = vmatprep.subr.mxu0 0.0
    %162 = vmatpush2.msra.mxu0 0.0
    %163 = vmatprep.subr.mxu0 0.0
    %164 = vmatpush2.msra.mxu0 0.0
    %165 = vmatprep.subr.mxu0 0.0
    %166 = vmatpush2.msra.mxu0 0.0
    %167 = vmatprep.subr.mxu0 0.0
    %168 = vmatpush2.msra.mxu0 0.0
    %169 = vmatprep.mubr.f32.mxu0 0.0
    %170 = vmatmul.mubr.f32.gmra.mxu0 %v82
    %v171 = vpop.f32.mrf.mxu0
    %v172 = vadd.f32 %v78, %v171
    %v173 = vpop.f32.mrf.mxu0
    %174 = vmatprep.mubr.f32.mxu0 0.0
    %175 = vmatmul.mubr.f32.gmra.mxu0 %v85
    %v176 = vpop.f32.mrf.mxu0
    %v177 = vadd.f32 %v78, %v176
    %v178 = vpop.f32.mrf.mxu0
    %179 = vmatprep.mubr.f32.mxu0 0.0
    %180 = vmatmul.mubr.f32.gmra.mxu0 %v88
    %v181 = vpop.f32.mrf.mxu0
    %v182 = vadd.f32 %v78, %v181
    %v183 = vpop.f32.mrf.mxu0
    %184 = vmatprep.mubr.f32.mxu0 0.0
    %185 = vmatmul.mubr.f32.gmra.mxu0 %v91
    %v186 = vpop.f32.mrf.mxu0
    %v187 = vadd.f32 %v78, %v186
    %v188 = vpop.f32.mrf.mxu0
    %189 = vmatprep.mubr.f32.mxu0 0.0
    %190 = vmatmul.mubr.f32.gmra.mxu0 %v94
    %v191 = vpop.f32.mrf.mxu0
    %v192 = vadd.f32 %v78, %v191
    %v193 = vpop.f32.mrf.mxu0
    %194 = vmatprep.mubr.f32.mxu0 0.0
    %195 = vmatmul.mubr.f32.gmra.mxu0 %v97
    %v196 = vpop.f32.mrf.mxu0
    %v197 = vadd.f32 %v78, %v196
    %v198 = vpop.f32.mrf.mxu0
    %199 = vmatprep.mubr.f32.mxu0 0.0
    %200 = vmatmul.mubr.f32.gmra.mxu0 %v100
    %v201 = vpop.f32.mrf.mxu0
    %v202 = vadd.f32 %v78, %v201
    %v203 = vpop.f32.mrf.mxu0
    %204 = vmatprep.mubr.f32.mxu0 0.0
    %205 = vmatmul.mubr.f32.gmra.mxu0 %v103
    %v206 = vpop.f32.mrf.mxu0
    %v207 = vadd.f32 %v78, %v206
    %v208 = vpop.f32.mrf.mxu0
    %209 = vdwg.mxu0
    %v210 = vmax.f32 %v172, 0.0
    %v211 = vmax.f32 %v177, 0.0
    %v212 = vmax.f32 %v182, 0.0
    %v213 = vmax.f32 %v187, 0.0
    %v214 = vmax.f32 %v192, 0.0
    %v215 = vmax.f32 %v197, 0.0
    %v216 = vmax.f32 %v202, 0.0
    %v217 = vmax.f32 %v207, 0.0
    %v218 = vld [vmem:[%s3] sm:$0xff]
    %v219 = vld [vmem:[%s3 + $0x8] sm:$0xff]
    %v220 = vld [vmem:[%s3 + $0x10] sm:$0xff]
    %v221 = vld [vmem:[%s3 + $0x18] sm:$0xff]
    %v222 = vld [vmem:[%s4] sm:$0x1]
    %v223 = vlaneseq
    %v224 = vshrl.u32 %v223, 7
    %v225 = vsub.s32 0, %v224
    %v226 = vrot.slane %v222, %v225
    %vm227 = vcmask 261120
    %v229 = vsel %vm227, %v210, 0
    %v232 = vsel %vm227, %v211, 0
    %v235 = vsel %vm227, %v212, 0
    %v238 = vsel %vm227, %v213, 0
    %v241 = vsel %vm227, %v214, 0
    %v244 = vsel %vm227, %v215, 0
    %v247 = vsel %vm227, %v216, 0
    %v250 = vsel %vm227, %v217, 0
    %252 = vmatprep.subr.mxu0 0.0
    %253 = vmatpush1.msra.mxu0 0.0
    %254 = vmatprep.subr.mxu0 0.0
    %255 = vmatpush1.msra.mxu0 0.0
    %256 = vmatprep.subr.mxu0 0.0
    %257 = vmatpush1.msra.mxu0 0.0
    %258 = vmatprep.subr.mxu0 0.0
    %259 = vmatpush1.msra.mxu0 0.0
    %260 = vmatprep.subr.mxu0 0.0
    %261 = vmatpush1.msra.mxu0 0.0
    %262 = vmatprep.subr.mxu0 0.0
    %263 = vmatpush1.msra.mxu0 0.0
    %264 = vmatprep.subr.mxu0 0.0
    %265 = vmatpush1.msra.mxu0 0.0
    %266 = vmatprep.subr.mxu0 0.0
    %267 = vmatpush1.msra.mxu0 0.0
    %268 = vmatprep.subr.mxu0 0.0
    %269 = vmatpush1.msra.mxu0 0.0
    %270 = vmatprep.subr.mxu0 0.0
    %271 = vmatpush1.msra.mxu0 0.0
    %272 = vmatprep.subr.mxu0 0.0
    %273 = vmatpush1.msra.mxu0 0.0
    %274 = vmatprep.subr.mxu0 0.0
    %275 = vmatpush1.msra.mxu0 0.0
    %276 = vmatprep.subr.mxu0 0.0
    %277 = vmatpush1.msra.mxu0 %v221
    %278 = vmatprep.subr.mxu0 0.0
    %279 = vmatpush1.msra.mxu0 %v220
    %280 = vmatprep.subr.mxu0 0.0
    %281 = vmatpush1.msra.mxu0 %v219
    %282 = vmatprep.subr.mxu0 0.0
    %283 = vmatpush1.msra.mxu0 %v218
    %284 = vmatprep.subr.mxu0 0.0
    %285 = vmatpush2.msra.mxu0 0.0
    %286 = vmatprep.subr.mxu0 0.0
    %287 = vmatpush2.msra.mxu0 0.0
    %288 = vmatprep.subr.mxu0 0.0
    %289 = vmatpush2.msra.mxu0 0.0
    %290 = vmatprep.subr.mxu0 0.0
    %291 = vmatpush2.msra.mxu0 0.0
    %292 = vmatprep.subr.mxu0 0.0
    %293 = vmatpush2.msra.mxu0 0.0
    %294 = vmatprep.subr.mxu0 0.0
    %295 = vmatpush2.msra.mxu0 0.0
    %296 = vmatprep.subr.mxu0 0.0
    %297 = vmatpush2.msra.mxu0 0.0
    %298 = vmatprep.subr.mxu0 0.0
    %299 = vmatpush2.msra.mxu0 0.0
    %300 = vmatprep.subr.mxu0 0.0
    %301 = vmatpush2.msra.mxu0 0.0
    %302 = vmatprep.subr.mxu0 0.0
    %303 = vmatpush2.msra.mxu0 0.0
    %304 = vmatprep.subr.mxu0 0.0
    %305 = vmatpush2.msra.mxu0 0.0
    %306 = vmatprep.subr.mxu0 0.0
    %307 = vmatpush2.msra.mxu0 0.0
    %308 = vmatprep.subr.mxu0 0.0
    %309 = vmatpush2.msra.mxu0 0.0
    %310 = vmatprep.subr.mxu0 0.0
    %311 = vmatpush2.msra.mxu0 0.0
    %312 = vmatprep.subr.mxu0 0.0
    %313 = vmatpush2.msra.mxu0 0.0
    %314 = vmatprep.subr.mxu0 0.0
    %315 = vmatpush2.msra.mxu0 0.0
    %316 = vmatprep.mubr.f32.mxu0 0.0
    %317 = vmatmul.mubr.f32.gmra.mxu0 %v229
    %v318 = vpop.f32.mrf.mxu0
    %v319 = vadd.f32 %v226, %v318
    %v320 = vpop.f32.mrf.mxu0
    %321 = vmatprep.mubr.f32.mxu0 0.0
    %322 = vmatmul.mubr.f32.gmra.mxu0 %v232
    %v323 = vpop.f32.mrf.mxu0
    %v324 = vadd.f32 %v226, %v323
    %v325 = vpop.f32.mrf.mxu0
    %326 = vmatprep.mubr.f32.mxu0 0.0
    %327 = vmatmul.mubr.f32.gmra.mxu0 %v235
    %v328 = vpop.f32.mrf.mxu0
    %v329 = vadd.f32 %v226, %v328
    %v330 = vpop.f32.mrf.mxu0
    %331 = vmatprep.mubr.f32.mxu0 0.0
    %332 = vmatmul.mubr.f32.gmra.mxu0 %v238
    %v333 = vpop.f32.mrf.mxu0
    %v334 = vadd.f32 %v226, %v333
    %v335 = vpop.f32.mrf.mxu0
    %336 = vmatprep.mubr.f32.mxu0 0.0
    %337 = vmatmul.mubr.f32.gmra.mxu0 %v241
    %v338 = vpop.f32.mrf.mxu0
    %v339 = vadd.f32 %v226, %v338
    %v340 = vpop.f32.mrf.mxu0
    %341 = vmatprep.mubr.f32.mxu0 0.0
    %342 = vmatmul.mubr.f32.gmra.mxu0 %v244
    %v343 = vpop.f32.mrf.mxu0
    %v344 = vadd.f32 %v226, %v343
    %v345 = vpop.f32.mrf.mxu0
    %346 = vmatprep.mubr.f32.mxu0 0.0
    %347 = vmatmul.mubr.f32.gmra.mxu0 %v247
    %v348 = vpop.f32.mrf.mxu0
    %v349 = vadd.f32 %v226, %v348
    %v350 = vpop.f32.mrf.mxu0
    %351 = vmatprep.mubr.f32.mxu0 0.0
    %352 = vmatmul.mubr.f32.gmra.mxu0 %v250
    %v353 = vpop.f32.mrf.mxu0
    %v354 = vadd.f32 %v226, %v353
    %v355 = vpop.f32.mrf.mxu0
    %356 = vdwg.mxu0
    %vm357 = vcmask 785408
    %358 = vst.msk [vmem:[#allocation2] sm:$0xff] %vm357, %v319
    %359 = vst.msk [vmem:[#allocation2 + $0x8] sm:$0xff] %vm357, %v324
    %360 = vst.msk [vmem:[#allocation2 + $0x10] sm:$0xff] %vm357, %v329
    %361 = vst.msk [vmem:[#allocation2 + $0x18] sm:$0xff] %vm357, %v334
    %362 = vst.msk [vmem:[#allocation2 + $0x20] sm:$0xff] %vm357, %v339
    %363 = vst.msk [vmem:[#allocation2 + $0x28] sm:$0xff] %vm357, %v344
    %364 = vst.msk [vmem:[#allocation2 + $0x30] sm:$0xff] %vm357, %v349
    %365 = vst.msk [vmem:[#allocation2 + $0x38] sm:$0xff] %vm357, %v354
    %v366 = vld [vmem:[%s7] sm:$0x3]
    %v368 = vlaneseq
    %v369 = vshrl.u32 %v368, 7
    %v370 = vsub.s32 0, %v369
    %v371 = vrot.slane %v366, %v370
    %v372 = vlaneseq
    %v373 = vshrl.u32 %v372, 7
    %v374 = vsub.s32 1, %v373
    %v375 = vrot.slane %v366, %v374
    %v378 = vld [vmem:[#allocation2] sm:$0xff]
    %v379 = vld [vmem:[%s5] sm:$0xff]
    %v380 = vld [vmem:[%s5 + $0x8] sm:$0xff]
    %v381 = vld [vmem:[%s5 + $0x10] sm:$0xff]
    %v382 = vld [vmem:[%s5 + $0x18] sm:$0xff]
    %v383 = vld [vmem:[%s4 + $0x1] sm:$0x1]
    %v384 = vlaneseq
    %v385 = vshrl.u32 %v384, 7
    %v386 = vsub.s32 0, %v385
    %v387 = vrot.slane %v383, %v386
    %v389 = vsel %vm227, 0.0, 0
    %391 = vmatprep.subr.mxu0 0.0
    %392 = vmatpush1.msra.mxu0 0.0
    %393 = vmatprep.subr.mxu0 0.0
    %394 = vmatpush1.msra.mxu0 0.0
    %395 = vmatprep.subr.mxu0 0.0
    %396 = vmatpush1.msra.mxu0 0.0
    %397 = vmatprep.subr.mxu0 0.0
    %398 = vmatpush1.msra.mxu0 0.0
    %399 = vmatprep.subr.mxu0 0.0
    %400 = vmatpush1.msra.mxu0 0.0
    %401 = vmatprep.subr.mxu0 0.0
    %402 = vmatpush1.msra.mxu0 0.0
    %403 = vmatprep.subr.mxu0 0.0
    %404 = vmatpush1.msra.mxu0 0.0
    %405 = vmatprep.subr.mxu0 0.0
    %406 = vmatpush1.msra.mxu0 0.0
    %407 = vmatprep.subr.mxu0 0.0
    %408 = vmatpush1.msra.mxu0 0.0
    %409 = vmatprep.subr.mxu0 0.0
    %410 = vmatpush1.msra.mxu0 0.0
    %411 = vmatprep.subr.mxu0 0.0
    %412 = vmatpush1.msra.mxu0 0.0
    %413 = vmatprep.subr.mxu0 0.0
    %414 = vmatpush1.msra.mxu0 0.0
    %415 = vmatprep.subr.mxu0 0.0
    %416 = vmatpush1.msra.mxu0 %v382
    %417 = vmatprep.subr.mxu0 0.0
    %418 = vmatpush1.msra.mxu0 %v381
    %419 = vmatprep.subr.mxu0 0.0
    %420 = vmatpush1.msra.mxu0 %v380
    %421 = vmatprep.subr.mxu0 0.0
    %422 = vmatpush1.msra.mxu0 %v379
    %423 = vmatprep.subr.mxu0 0.0
    %424 = vmatpush2.msra.mxu0 0.0
    %425 = vmatprep.subr.mxu0 0.0
    %426 = vmatpush2.msra.mxu0 0.0
    %427 = vmatprep.subr.mxu0 0.0
    %428 = vmatpush2.msra.mxu0 0.0
    %429 = vmatprep.subr.mxu0 0.0
    %430 = vmatpush2.msra.mxu0 0.0
    %431 = vmatprep.subr.mxu0 0.0
    %432 = vmatpush2.msra.mxu0 0.0
    %433 = vmatprep.subr.mxu0 0.0
    %434 = vmatpush2.msra.mxu0 0.0
    %435 = vmatprep.subr.mxu0 0.0
    %436 = vmatpush2.msra.mxu0 0.0
    %437 = vmatprep.subr.mxu0 0.0
    %438 = vmatpush2.msra.mxu0 0.0
    %439 = vmatprep.subr.mxu0 0.0
    %440 = vmatpush2.msra.mxu0 0.0
    %441 = vmatprep.subr.mxu0 0.0
    %442 = vmatpush2.msra.mxu0 0.0
    %443 = vmatprep.subr.mxu0 0.0
    %444 = vmatpush2.msra.mxu0 0.0
    %445 = vmatprep.subr.mxu0 0.0
    %446 = vmatpush2.msra.mxu0 0.0
    %447 = vmatprep.subr.mxu0 0.0
    %448 = vmatpush2.msra.mxu0 0.0
    %449 = vmatprep.subr.mxu0 0.0
    %450 = vmatpush2.msra.mxu0 0.0
    %451 = vmatprep.subr.mxu0 0.0
    %452 = vmatpush2.msra.mxu0 0.0
    %453 = vmatprep.subr.mxu0 0.0
    %454 = vmatpush2.msra.mxu0 0.0
    %455 = vmatprep.mubr.f32.mxu0 0.0
    %456 = vmatmul.mubr.f32.gmra.mxu0 %v389
    %v457 = vpop.f32.mrf.mxu0
    %v458 = vadd.f32 %v387, %v457
    %v459 = vpop.f32.mrf.mxu0
    %460 = vdwg.mxu0
    %v461 = vadd.f32 %v378, %v458
    %v462 = vxor.u32 %v461, 2147483648
    %v463 = vmul.f32 %v462, 1.442695
    %v464 = vpow.pop %v463
    %v465 = vadd.f32 %v464, 1.0
    %v466 = vrcp.pop %v465
    %v467 = vmul.f32 1.0, %v466
    %469 = vrot.lane.b32.xlu0 %v458, 64
    %v470 = vpop.permute.xlu0 %469
    %v472 = vmul.f32 %v467, %v470
    %474 = vrot.lane.b32.xlu0 %v472, 64
    %v475 = vpop.permute.xlu0 %474
    %v477 = vadd.f32 %v378, %v475
    %v478 = vtanh.pop %v477
    %v479 = vsub.f32 1.0, %v467
    %481 = vrot.lane.b32.xlu0 %v478, 96
    %v482 = vpop.permute.xlu0 %481
    %v484 = vmul.f32 %v479, %v482
    %v485 = vmul.f32 %v467, 0.0
    %v486 = vadd.f32 %v484, %v485
    %v487 = vld [vmem:[#allocation3] sm:$0xff]
    %v488 = vld [vmem:[#allocation3 + $0x8] sm:$0xff]
    %v489 = vld [vmem:[#allocation3 + $0x10] sm:$0xff]
    %v490 = vld [vmem:[#allocation3 + $0x18] sm:$0xff]
    %v491 = vld [vmem:[#allocation3 + $0x20] sm:$0xff]
    %v492 = vld [vmem:[#allocation3 + $0x28] sm:$0xff]
    %v493 = vld [vmem:[#allocation3 + $0x30] sm:$0xff]
    %v494 = vld [vmem:[#allocation3 + $0x38] sm:$0xff]
    %496 = vrot.lane.b32.xlu0 %v486, 96
    %v497 = vpop.permute.xlu0 %496
    %v498 = vsel %vm227, %v497, 0
    %500 = vmatprep.subr.mxu0 0.0
    %501 = vmatpush1.msra.mxu0 0.0
    %502 = vmatprep.subr.mxu0 0.0
    %503 = vmatpush1.msra.mxu0 0.0
    %504 = vmatprep.subr.mxu0 0.0
    %505 = vmatpush1.msra.mxu0 0.0
    %506 = vmatprep.subr.mxu0 0.0
    %507 = vmatpush1.msra.mxu0 0.0
    %508 = vmatprep.subr.mxu0 0.0
    %509 = vmatpush1.msra.mxu0 0.0
    %510 = vmatprep.subr.mxu0 0.0
    %511 = vmatpush1.msra.mxu0 0.0
    %512 = vmatprep.subr.mxu0 0.0
    %513 = vmatpush1.msra.mxu0 0.0
    %514 = vmatprep.subr.mxu0 0.0
    %515 = vmatpush1.msra.mxu0 0.0
    %516 = vmatprep.subr.mxu0 0.0
    %517 = vmatpush1.msra.mxu0 0.0
    %518 = vmatprep.subr.mxu0 0.0
    %519 = vmatpush1.msra.mxu0 0.0
    %520 = vmatprep.subr.mxu0 0.0
    %521 = vmatpush1.msra.mxu0 0.0
    %522 = vmatprep.subr.mxu0 0.0
    %523 = vmatpush1.msra.mxu0 0.0
    %524 = vmatprep.subr.mxu0 %v494
    %525 = vmatpush1.msra.mxu0 %v493
    %526 = vmatprep.subr.mxu0 %v492
    %527 = vmatpush1.msra.mxu0 %v491
    %528 = vmatprep.subr.mxu0 %v490
    %529 = vmatpush1.msra.mxu0 %v489
    %530 = vmatprep.subr.mxu0 %v488
    %531 = vmatpush1.msra.mxu0 %v487
    %532 = vmatprep.subr.mxu0 0.0
    %533 = vmatpush2.msra.mxu0 0.0
    %534 = vmatprep.subr.mxu0 0.0
    %535 = vmatpush2.msra.mxu0 0.0
    %536 = vmatprep.subr.mxu0 0.0
    %537 = vmatpush2.msra.mxu0 0.0
    %538 = vmatprep.subr.mxu0 0.0
    %539 = vmatpush2.msra.mxu0 0.0
    %540 = vmatprep.subr.mxu0 0.0
    %541 = vmatpush2.msra.mxu0 0.0
    %542 = vmatprep.subr.mxu0 0.0
    %543 = vmatpush2.msra.mxu0 0.0
    %544 = vmatprep.subr.mxu0 0.0
    %545 = vmatpush2.msra.mxu0 0.0
    %546 = vmatprep.subr.mxu0 0.0
    %547 = vmatpush2.msra.mxu0 0.0
    %548 = vmatprep.subr.mxu0 0.0
    %549 = vmatpush2.msra.mxu0 0.0
    %550 = vmatprep.subr.mxu0 0.0
    %551 = vmatpush2.msra.mxu0 0.0
    %552 = vmatprep.subr.mxu0 0.0
    %553 = vmatpush2.msra.mxu0 0.0
    %554 = vmatprep.subr.mxu0 0.0
    %555 = vmatpush2.msra.mxu0 0.0
    %556 = vmatprep.subr.mxu0 0.0
    %557 = vmatpush2.msra.mxu0 0.0
    %558 = vmatprep.subr.mxu0 0.0
    %559 = vmatpush2.msra.mxu0 0.0
    %560 = vmatprep.subr.mxu0 0.0
    %561 = vmatpush2.msra.mxu0 0.0
    %562 = vmatprep.subr.mxu0 0.0
    %563 = vmatpush2.msra.mxu0 0.0
    %564 = vmatprep.mubr.f32.mxu0 0.0
    %565 = vmatmul.mubr.f32.gmra.mxu0 %v498
    %v566 = vpop.f32.mrf.mxu0
    %v567 = vadd.f32 0.0, %v566
    %v568 = vpop.f32.mrf.mxu0
    %v569 = vadd.f32 0.0, %v568
    %570 = vdwg.mxu0
    %v571 = vadd.f32 %v371, %v567
    %v572 = vadd.f32 %v375, %v569
    %s573 = scalar_lea.vmem [#allocation2], 8
    %v574 = vld [vmem:[%s573] sm:$0xff]
    %575 = vmatprep.subr.mxu0 0.0
    %576 = vmatpush1.msra.mxu0 0.0
    %577 = vmatprep.subr.mxu0 0.0
    %578 = vmatpush1.msra.mxu0 0.0
    %579 = vmatprep.subr.mxu0 0.0
    %580 = vmatpush1.msra.mxu0 0.0
    %581 = vmatprep.subr.mxu0 0.0
    %582 = vmatpush1.msra.mxu0 0.0
    %583 = vmatprep.subr.mxu0 0.0
    %584 = vmatpush1.msra.mxu0 0.0
    %585 = vmatprep.subr.mxu0 0.0
    %586 = vmatpush1.msra.mxu0 0.0
    %587 = vmatprep.subr.mxu0 0.0
    %588 = vmatpush1.msra.mxu0 0.0
    %589 = vmatprep.subr.mxu0 0.0
    %590 = vmatpush1.msra.mxu0 0.0
    %591 = vmatprep.subr.mxu0 0.0
    %592 = vmatpush1.msra.mxu0 0.0
    %593 = vmatprep.subr.mxu0 0.0
    %594 = vmatpush1.msra.mxu0 0.0
    %595 = vmatprep.subr.mxu0 0.0
    %596 = vmatpush1.msra.mxu0 0.0
    %597 = vmatprep.subr.mxu0 0.0
    %598 = vmatpush1.msra.mxu0 0.0
    %599 = vmatprep.subr.mxu0 0.0
    %600 = vmatpush1.msra.mxu0 %v382
    %601 = vmatprep.subr.mxu0 0.0
    %602 = vmatpush1.msra.mxu0 %v381
    %603 = vmatprep.subr.mxu0 0.0
    %604 = vmatpush1.msra.mxu0 %v380
    %605 = vmatprep.subr.mxu0 0.0
    %606 = vmatpush1.msra.mxu0 %v379
    %607 = vmatprep.subr.mxu0 0.0
    %608 = vmatpush2.msra.mxu0 0.0
    %609 = vmatprep.subr.mxu0 0.0
    %610 = vmatpush2.msra.mxu0 0.0
    %611 = vmatprep.subr.mxu0 0.0
    %612 = vmatpush2.msra.mxu0 0.0
    %613 = vmatprep.subr.mxu0 0.0
    %614 = vmatpush2.msra.mxu0 0.0
    %615 = vmatprep.subr.mxu0 0.0
    %616 = vmatpush2.msra.mxu0 0.0
    %617 = vmatprep.subr.mxu0 0.0
    %618 = vmatpush2.msra.mxu0 0.0
    %619 = vmatprep.subr.mxu0 0.0
    %620 = vmatpush2.msra.mxu0 0.0
    %621 = vmatprep.subr.mxu0 0.0
    %622 = vmatpush2.msra.mxu0 0.0
    %623 = vmatprep.subr.mxu0 0.0
    %624 = vmatpush2.msra.mxu0 0.0
    %625 = vmatprep.subr.mxu0 0.0
    %626 = vmatpush2.msra.mxu0 0.0
    %627 = vmatprep.subr.mxu0 0.0
    %628 = vmatpush2.msra.mxu0 0.0
    %629 = vmatprep.subr.mxu0 0.0
    %630 = vmatpush2.msra.mxu0 0.0
    %631 = vmatprep.subr.mxu0 0.0
    %632 = vmatpush2.msra.mxu0 0.0
    %633 = vmatprep.subr.mxu0 0.0
    %634 = vmatpush2.msra.mxu0 0.0
    %635 = vmatprep.subr.mxu0 0.0
    %636 = vmatpush2.msra.mxu0 0.0
    %637 = vmatprep.subr.mxu0 0.0
    %638 = vmatpush2.msra.mxu0 0.0
    %639 = vmatprep.mubr.f32.mxu0 0.0
    %640 = vmatmul.mubr.f32.gmra.mxu0 %v498
    %v641 = vpop.f32.mrf.mxu0
    %v642 = vadd.f32 %v387, %v641
    %v643 = vpop.f32.mrf.mxu0
    %644 = vdwg.mxu0
    %v645 = vadd.f32 %v574, %v642
    %v646 = vxor.u32 %v645, 2147483648
    %v647 = vmul.f32 %v646, 1.442695
    %v648 = vpow.pop %v647
    %v649 = vadd.f32 %v648, 1.0
    %v650 = vrcp.pop %v649
    %v651 = vmul.f32 1.0, %v650
    %653 = vrot.lane.b32.xlu0 %v642, 64
    %v654 = vpop.permute.xlu0 %653
    %v656 = vmul.f32 %v651, %v654
    %658 = vrot.lane.b32.xlu0 %v656, 64
    %v659 = vpop.permute.xlu0 %658
    %v661 = vadd.f32 %v574, %v659
    %v662 = vtanh.pop %v661
    %v663 = vsub.f32 1.0, %v651
    %665 = vrot.lane.b32.xlu0 %v662, 96
    %v666 = vpop.permute.xlu0 %665
    %v668 = vmul.f32 %v663, %v666
    %v669 = vmul.f32 %v651, %v486
    %v670 = vadd.f32 %v668, %v669
    %s671 = scalar_lea.vmem [#allocation3], 64
    %v672 = vld [vmem:[%s671] sm:$0xff]
    %v673 = vld [vmem:[%s671 + $0x8] sm:$0xff]
    %v674 = vld [vmem:[%s671 + $0x10] sm:$0xff]
    %v675 = vld [vmem:[%s671 + $0x18] sm:$0xff]
    %v676 = vld [vmem:[%s671 + $0x20] sm:$0xff]
    %v677 = vld [vmem:[%s671 + $0x28] sm:$0xff]
    %v678 = vld [vmem:[%s671 + $0x30] sm:$0xff]
    %v679 = vld [vmem:[%s671 + $0x38] sm:$0xff]
    %681 = vrot.lane.b32.xlu0 %v670, 96
    %v682 = vpop.permute.xlu0 %681
    %v683 = vsel %vm227, %v682, 0
    %685 = vmatprep.subr.mxu0 0.0
    %686 = vmatpush1.msra.mxu0 0.0
    %687 = vmatprep.subr.mxu0 0.0
    %688 = vmatpush1.msra.mxu0 0.0
    %689 = vmatprep.subr.mxu0 0.0
    %690 = vmatpush1.msra.mxu0 0.0
    %691 = vmatprep.subr.mxu0 0.0
    %692 = vmatpush1.msra.mxu0 0.0
    %693 = vmatprep.subr.mxu0 0.0
    %694 = vmatpush1.msra.mxu0 0.0
    %695 = vmatprep.subr.mxu0 0.0
    %696 = vmatpush1.msra.mxu0 0.0
    %697 = vmatprep.subr.mxu0 0.0
    %698 = vmatpush1.msra.mxu0 0.0
    %699 = vmatprep.subr.mxu0 0.0
    %700 = vmatpush1.msra.mxu0 0.0
    %701 = vmatprep.subr.mxu0 0.0
    %702 = vmatpush1.msra.mxu0 0.0
    %703 = vmatprep.subr.mxu0 0.0
    %704 = vmatpush1.msra.mxu0 0.0
    %705 = vmatprep.subr.mxu0 0.0
    %706 = vmatpush1.msra.mxu0 0.0
    %707 = vmatprep.subr.mxu0 0.0
    %708 = vmatpush1.msra.mxu0 0.0
    %709 = vmatprep.subr.mxu0 %v679
    %710 = vmatpush1.msra.mxu0 %v678
    %711 = vmatprep.subr.mxu0 %v677
    %712 = vmatpush1.msra.mxu0 %v676
    %713 = vmatprep.subr.mxu0 %v675
    %714 = vmatpush1.msra.mxu0 %v674
    %715 = vmatprep.subr.mxu0 %v673
    %716 = vmatpush1.msra.mxu0 %v672
    %717 = vmatprep.subr.mxu0 0.0
    %718 = vmatpush2.msra.mxu0 0.0
    %719 = vmatprep.subr.mxu0 0.0
    %720 = vmatpush2.msra.mxu0 0.0
    %721 = vmatprep.subr.mxu0 0.0
    %722 = vmatpush2.msra.mxu0 0.0
    %723 = vmatprep.subr.mxu0 0.0
    %724 = vmatpush2.msra.mxu0 0.0
    %725 = vmatprep.subr.mxu0 0.0
    %726 = vmatpush2.msra.mxu0 0.0
    %727 = vmatprep.subr.mxu0 0.0
    %728 = vmatpush2.msra.mxu0 0.0
    %729 = vmatprep.subr.mxu0 0.0
    %730 = vmatpush2.msra.mxu0 0.0
    %731 = vmatprep.subr.mxu0 0.0
    %732 = vmatpush2.msra.mxu0 0.0
    %733 = vmatprep.subr.mxu0 0.0
    %734 = vmatpush2.msra.mxu0 0.0
    %735 = vmatprep.subr.mxu0 0.0
    %736 = vmatpush2.msra.mxu0 0.0
    %737 = vmatprep.subr.mxu0 0.0
    %738 = vmatpush2.msra.mxu0 0.0
    %739 = vmatprep.subr.mxu0 0.0
    %740 = vmatpush2.msra.mxu0 0.0
    %741 = vmatprep.subr.mxu0 0.0
    %742 = vmatpush2.msra.mxu0 0.0
    %743 = vmatprep.subr.mxu0 0.0
    %744 = vmatpush2.msra.mxu0 0.0
    %745 = vmatprep.subr.mxu0 0.0
    %746 = vmatpush2.msra.mxu0 0.0
    %747 = vmatprep.subr.mxu0 0.0
    %748 = vmatpush2.msra.mxu0 0.0
    %749 = vmatprep.mubr.f32.mxu0 0.0
    %750 = vmatmul.mubr.f32.gmra.mxu0 %v683
    %v751 = vpop.f32.mrf.mxu0
    %v752 = vadd.f32 0.0, %v751
    %v753 = vpop.f32.mrf.mxu0
    %v754 = vadd.f32 0.0, %v753
    %755 = vdwg.mxu0
    %v756 = vadd.f32 %v571, %v752
    %v757 = vadd.f32 %v572, %v754
    %s758 = scalar_lea.vmem [#allocation2], 16
    %v759 = vld [vmem:[%s758] sm:$0xff]
    %760 = vmatprep.subr.mxu0 0.0
    %761 = vmatpush1.msra.mxu0 0.0
    %762 = vmatprep.subr.mxu0 0.0
    %763 = vmatpush1.msra.mxu0 0.0
    %764 = vmatprep.subr.mxu0 0.0
    %765 = vmatpush1.msra.mxu0 0.0
    %766 = vmatprep.subr.mxu0 0.0
    %767 = vmatpush1.msra.mxu0 0.0
    %768 = vmatprep.subr.mxu0 0.0
    %769 = vmatpush1.msra.mxu0 0.0
    %770 = vmatprep.subr.mxu0 0.0
    %771 = vmatpush1.msra.mxu0 0.0
    %772 = vmatprep.subr.mxu0 0.0
    %773 = vmatpush1.msra.mxu0 0.0
    %774 = vmatprep.subr.mxu0 0.0
    %775 = vmatpush1.msra.mxu0 0.0
    %776 = vmatprep.subr.mxu0 0.0
    %777 = vmatpush1.msra.mxu0 0.0
    %778 = vmatprep.subr.mxu0 0.0
    %779 = vmatpush1.msra.mxu0 0.0
    %780 = vmatprep.subr.mxu0 0.0
    %781 = vmatpush1.msra.mxu0 0.0
    %782 = vmatprep.subr.mxu0 0.0
    %783 = vmatpush1.msra.mxu0 0.0
    %784 = vmatprep.subr.mxu0 0.0
    %785 = vmatpush1.msra.mxu0 %v382
    %786 = vmatprep.subr.mxu0 0.0
    %787 = vmatpush1.msra.mxu0 %v381
    %788 = vmatprep.subr.mxu0 0.0
    %789 = vmatpush1.msra.mxu0 %v380
    %790 = vmatprep.subr.mxu0 0.0
    %791 = vmatpush1.msra.mxu0 %v379
    %792 = vmatprep.subr.mxu0 0.0
    %793 = vmatpush2.msra.mxu0 0.0
    %794 = vmatprep.subr.mxu0 0.0
    %795 = vmatpush2.msra.mxu0 0.0
    %796 = vmatprep.subr.mxu0 0.0
    %797 = vmatpush2.msra.mxu0 0.0
    %798 = vmatprep.subr.mxu0 0.0
    %799 = vmatpush2.msra.mxu0 0.0
    %800 = vmatprep.subr.mxu0 0.0
    %801 = vmatpush2.msra.mxu0 0.0
    %802 = vmatprep.subr.mxu0 0.0
    %803 = vmatpush2.msra.mxu0 0.0
    %804 = vmatprep.subr.mxu0 0.0
    %805 = vmatpush2.msra.mxu0 0.0
    %806 = vmatprep.subr.mxu0 0.0
    %807 = vmatpush2.msra.mxu0 0.0
    %808 = vmatprep.subr.mxu0 0.0
    %809 = vmatpush2.msra.mxu0 0.0
    %810 = vmatprep.subr.mxu0 0.0
    %811 = vmatpush2.msra.mxu0 0.0
    %812 = vmatprep.subr.mxu0 0.0
    %813 = vmatpush2.msra.mxu0 0.0
    %814 = vmatprep.subr.mxu0 0.0
    %815 = vmatpush2.msra.mxu0 0.0
    %816 = vmatprep.subr.mxu0 0.0
    %817 = vmatpush2.msra.mxu0 0.0
    %818 = vmatprep.subr.mxu0 0.0
    %819 = vmatpush2.msra.mxu0 0.0
    %820 = vmatprep.subr.mxu0 0.0
    %821 = vmatpush2.msra.mxu0 0.0
    %822 = vmatprep.subr.mxu0 0.0
    %823 = vmatpush2.msra.mxu0 0.0
    %824 = vmatprep.mubr.f32.mxu0 0.0
    %825 = vmatmul.mubr.f32.gmra.mxu0 %v683
    %v826 = vpop.f32.mrf.mxu0
    %v827 = vadd.f32 %v387, %v826
    %v828 = vpop.f32.mrf.mxu0
    %829 = vdwg.mxu0
    %v830 = vadd.f32 %v759, %v827
    %v831 = vxor.u32 %v830, 2147483648
    %v832 = vmul.f32 %v831, 1.442695
    %v833 = vpow.pop %v832
    %v834 = vadd.f32 %v833, 1.0
    %v835 = vrcp.pop %v834
    %v836 = vmul.f32 1.0, %v835
    %838 = vrot.lane.b32.xlu0 %v827, 64
    %v839 = vpop.permute.xlu0 %838
    %v841 = vmul.f32 %v836, %v839
    %843 = vrot.lane.b32.xlu0 %v841, 64
    %v844 = vpop.permute.xlu0 %843
    %v846 = vadd.f32 %v759, %v844
    %v847 = vtanh.pop %v846
    %v848 = vsub.f32 1.0, %v836
    %850 = vrot.lane.b32.xlu0 %v847, 96
    %v851 = vpop.permute.xlu0 %850
    %v853 = vmul.f32 %v848, %v851
    %v854 = vmul.f32 %v836, %v670
    %v855 = vadd.f32 %v853, %v854
    %s856 = scalar_lea.vmem [#allocation3], 128
    %v857 = vld [vmem:[%s856] sm:$0xff]
    %v858 = vld [vmem:[%s856 + $0x8] sm:$0xff]
    %v859 = vld [vmem:[%s856 + $0x10] sm:$0xff]
    %v860 = vld [vmem:[%s856 + $0x18] sm:$0xff]
    %v861 = vld [vmem:[%s856 + $0x20] sm:$0xff]
    %v862 = vld [vmem:[%s856 + $0x28] sm:$0xff]
    %v863 = vld [vmem:[%s856 + $0x30] sm:$0xff]
    %v864 = vld [vmem:[%s856 + $0x38] sm:$0xff]
    %866 = vrot.lane.b32.xlu0 %v855, 96
    %v867 = vpop.permute.xlu0 %866
    %v868 = vsel %vm227, %v867, 0
    %870 = vmatprep.subr.mxu0 0.0
    %871 = vmatpush1.msra.mxu0 0.0
    %872 = vmatprep.subr.mxu0 0.0
    %873 = vmatpush1.msra.mxu0 0.0
    %874 = vmatprep.subr.mxu0 0.0
    %875 = vmatpush1.msra.mxu0 0.0
    %876 = vmatprep.subr.mxu0 0.0
    %877 = vmatpush1.msra.mxu0 0.0
    %878 = vmatprep.subr.mxu0 0.0
    %879 = vmatpush1.msra.mxu0 0.0
    %880 = vmatprep.subr.mxu0 0.0
    %881 = vmatpush1.msra.mxu0 0.0
    %882 = vmatprep.subr.mxu0 0.0
    %883 = vmatpush1.msra.mxu0 0.0
    %884 = vmatprep.subr.mxu0 0.0
    %885 = vmatpush1.msra.mxu0 0.0
    %886 = vmatprep.subr.mxu0 0.0
    %887 = vmatpush1.msra.mxu0 0.0
    %888 = vmatprep.subr.mxu0 0.0
    %889 = vmatpush1.msra.mxu0 0.0
    %890 = vmatprep.subr.mxu0 0.0
    %891 = vmatpush1.msra.mxu0 0.0
    %892 = vmatprep.subr.mxu0 0.0
    %893 = vmatpush1.msra.mxu0 0.0
    %894 = vmatprep.subr.mxu0 %v864
    %895 = vmatpush1.msra.mxu0 %v863
    %896 = vmatprep.subr.mxu0 %v862
    %897 = vmatpush1.msra.mxu0 %v861
    %898 = vmatprep.subr.mxu0 %v860
    %899 = vmatpush1.msra.mxu0 %v859
    %900 = vmatprep.subr.mxu0 %v858
    %901 = vmatpush1.msra.mxu0 %v857
    %902 = vmatprep.subr.mxu0 0.0
    %903 = vmatpush2.msra.mxu0 0.0
    %904 = vmatprep.subr.mxu0 0.0
    %905 = vmatpush2.msra.mxu0 0.0
    %906 = vmatprep.subr.mxu0 0.0
    %907 = vmatpush2.msra.mxu0 0.0
    %908 = vmatprep.subr.mxu0 0.0
    %909 = vmatpush2.msra.mxu0 0.0
    %910 = vmatprep.subr.mxu0 0.0
    %911 = vmatpush2.msra.mxu0 0.0
    %912 = vmatprep.subr.mxu0 0.0
    %913 = vmatpush2.msra.mxu0 0.0
    %914 = vmatprep.subr.mxu0 0.0
    %915 = vmatpush2.msra.mxu0 0.0
    %916 = vmatprep.subr.mxu0 0.0
    %917 = vmatpush2.msra.mxu0 0.0
    %918 = vmatprep.subr.mxu0 0.0
    %919 = vmatpush2.msra.mxu0 0.0
    %920 = vmatprep.subr.mxu0 0.0
    %921 = vmatpush2.msra.mxu0 0.0
    %922 = vmatprep.subr.mxu0 0.0
    %923 = vmatpush2.msra.mxu0 0.0
    %924 = vmatprep.subr.mxu0 0.0
    %925 = vmatpush2.msra.mxu0 0.0
    %926 = vmatprep.subr.mxu0 0.0
    %927 = vmatpush2.msra.mxu0 0.0
    %928 = vmatprep.subr.mxu0 0.0
    %929 = vmatpush2.msra.mxu0 0.0
    %930 = vmatprep.subr.mxu0 0.0
    %931 = vmatpush2.msra.mxu0 0.0
    %932 = vmatprep.subr.mxu0 0.0
    %933 = vmatpush2.msra.mxu0 0.0
    %934 = vmatprep.mubr.f32.mxu0 0.0
    %935 = vmatmul.mubr.f32.gmra.mxu0 %v868
    %v936 = vpop.f32.mrf.mxu0
    %v937 = vadd.f32 0.0, %v936
    %v938 = vpop.f32.mrf.mxu0
    %v939 = vadd.f32 0.0, %v938
    %940 = vdwg.mxu0
    %v941 = vadd.f32 %v756, %v937
    %v942 = vadd.f32 %v757, %v939
    %s943 = scalar_lea.vmem [#allocation2], 24
    %v944 = vld [vmem:[%s943] sm:$0xff]
    %945 = vmatprep.subr.mxu0 0.0
    %946 = vmatpush1.msra.mxu0 0.0
    %947 = vmatprep.subr.mxu0 0.0
    %948 = vmatpush1.msra.mxu0 0.0
    %949 = vmatprep.subr.mxu0 0.0
    %950 = vmatpush1.msra.mxu0 0.0
    %951 = vmatprep.subr.mxu0 0.0
    %952 = vmatpush1.msra.mxu0 0.0
    %953 = vmatprep.subr.mxu0 0.0
    %954 = vmatpush1.msra.mxu0 0.0
    %955 = vmatprep.subr.mxu0 0.0
    %956 = vmatpush1.msra.mxu0 0.0
    %957 = vmatprep.subr.mxu0 0.0
    %958 = vmatpush1.msra.mxu0 0.0
    %959 = vmatprep.subr.mxu0 0.0
    %960 = vmatpush1.msra.mxu0 0.0
    %961 = vmatprep.subr.mxu0 0.0
    %962 = vmatpush1.msra.mxu0 0.0
    %963 = vmatprep.subr.mxu0 0.0
    %964 = vmatpush1.msra.mxu0 0.0
    %965 = vmatprep.subr.mxu0 0.0
    %966 = vmatpush1.msra.mxu0 0.0
    %967 = vmatprep.subr.mxu0 0.0
    %968 = vmatpush1.msra.mxu0 0.0
    %969 = vmatprep.subr.mxu0 0.0
    %970 = vmatpush1.msra.mxu0 %v382
    %971 = vmatprep.subr.mxu0 0.0
    %972 = vmatpush1.msra.mxu0 %v381
    %973 = vmatprep.subr.mxu0 0.0
    %974 = vmatpush1.msra.mxu0 %v380
    %975 = vmatprep.subr.mxu0 0.0
    %976 = vmatpush1.msra.mxu0 %v379
    %977 = vmatprep.subr.mxu0 0.0
    %978 = vmatpush2.msra.mxu0 0.0
    %979 = vmatprep.subr.mxu0 0.0
    %980 = vmatpush2.msra.mxu0 0.0
    %981 = vmatprep.subr.mxu0 0.0
    %982 = vmatpush2.msra.mxu0 0.0
    %983 = vmatprep.subr.mxu0 0.0
    %984 = vmatpush2.msra.mxu0 0.0
    %985 = vmatprep.subr.mxu0 0.0
    %986 = vmatpush2.msra.mxu0 0.0
    %987 = vmatprep.subr.mxu0 0.0
    %988 = vmatpush2.msra.mxu0 0.0
    %989 = vmatprep.subr.mxu0 0.0
    %990 = vmatpush2.msra.mxu0 0.0
    %991 = vmatprep.subr.mxu0 0.0
    %992 = vmatpush2.msra.mxu0 0.0
    %993 = vmatprep.subr.mxu0 0.0
    %994 = vmatpush2.msra.mxu0 0.0
    %995 = vmatprep.subr.mxu0 0.0
    %996 = vmatpush2.msra.mxu0 0.0
    %997 = vmatprep.subr.mxu0 0.0
    %998 = vmatpush2.msra.mxu0 0.0
    %999 = vmatprep.subr.mxu0 0.0
    %1000 = vmatpush2.msra.mxu0 0.0
    %1001 = vmatprep.subr.mxu0 0.0
    %1002 = vmatpush2.msra.mxu0 0.0
    %1003 = vmatprep.subr.mxu0 0.0
    %1004 = vmatpush2.msra.mxu0 0.0
    %1005 = vmatprep.subr.mxu0 0.0
    %1006 = vmatpush2.msra.mxu0 0.0
    %1007 = vmatprep.subr.mxu0 0.0
    %1008 = vmatpush2.msra.mxu0 0.0
    %1009 = vmatprep.mubr.f32.mxu0 0.0
    %1010 = vmatmul.mubr.f32.gmra.mxu0 %v868
    %v1011 = vpop.f32.mrf.mxu0
    %v1012 = vadd.f32 %v387, %v1011
    %v1013 = vpop.f32.mrf.mxu0
    %1014 = vdwg.mxu0
    %v1015 = vadd.f32 %v944, %v1012
    %v1016 = vxor.u32 %v1015, 2147483648
    %v1017 = vmul.f32 %v1016, 1.442695
    %v1018 = vpow.pop %v1017
    %v1019 = vadd.f32 %v1018, 1.0
    %v1020 = vrcp.pop %v1019
    %v1021 = vmul.f32 1.0, %v1020
    %1023 = vrot.lane.b32.xlu0 %v1012, 64
    %v1024 = vpop.permute.xlu0 %1023
    %v1026 = vmul.f32 %v1021, %v1024
    %1028 = vrot.lane.b32.xlu0 %v1026, 64
    %v1029 = vpop.permute.xlu0 %1028
    %v1031 = vadd.f32 %v944, %v1029
    %v1032 = vtanh.pop %v1031
    %v1033 = vsub.f32 1.0, %v1021
    %1035 = vrot.lane.b32.xlu0 %v1032, 96
    %v1036 = vpop.permute.xlu0 %1035
    %v1038 = vmul.f32 %v1033, %v1036
    %v1039 = vmul.f32 %v1021, %v855
    %v1040 = vadd.f32 %v1038, %v1039
    %s1041 = scalar_lea.vmem [#allocation3], 192
    %v1042 = vld [vmem:[%s1041] sm:$0xff]
    %v1043 = vld [vmem:[%s1041 + $0x8] sm:$0xff]
    %v1044 = vld [vmem:[%s1041 + $0x10] sm:$0xff]
    %v1045 = vld [vmem:[%s1041 + $0x18] sm:$0xff]
    %v1046 = vld [vmem:[%s1041 + $0x20] sm:$0xff]
    %v1047 = vld [vmem:[%s1041 + $0x28] sm:$0xff]
    %v1048 = vld [vmem:[%s1041 + $0x30] sm:$0xff]
    %v1049 = vld [vmem:[%s1041 + $0x38] sm:$0xff]
    %1051 = vrot.lane.b32.xlu0 %v1040, 96
    %v1052 = vpop.permute.xlu0 %1051
    %v1053 = vsel %vm227, %v1052, 0
    %1055 = vmatprep.subr.mxu0 0.0
    %1056 = vmatpush1.msra.mxu0 0.0
    %1057 = vmatprep.subr.mxu0 0.0
    %1058 = vmatpush1.msra.mxu0 0.0
    %1059 = vmatprep.subr.mxu0 0.0
    %1060 = vmatpush1.msra.mxu0 0.0
    %1061 = vmatprep.subr.mxu0 0.0
    %1062 = vmatpush1.msra.mxu0 0.0
    %1063 = vmatprep.subr.mxu0 0.0
    %1064 = vmatpush1.msra.mxu0 0.0
    %1065 = vmatprep.subr.mxu0 0.0
    %1066 = vmatpush1.msra.mxu0 0.0
    %1067 = vmatprep.subr.mxu0 0.0
    %1068 = vmatpush1.msra.mxu0 0.0
    %1069 = vmatprep.subr.mxu0 0.0
    %1070 = vmatpush1.msra.mxu0 0.0
    %1071 = vmatprep.subr.mxu0 0.0
    %1072 = vmatpush1.msra.mxu0 0.0
    %1073 = vmatprep.subr.mxu0 0.0
    %1074 = vmatpush1.msra.mxu0 0.0
    %1075 = vmatprep.subr.mxu0 0.0
    %1076 = vmatpush1.msra.mxu0 0.0
    %1077 = vmatprep.subr.mxu0 0.0
    %1078 = vmatpush1.msra.mxu0 0.0
    %1079 = vmatprep.subr.mxu0 %v1049
    %1080 = vmatpush1.msra.mxu0 %v1048
    %1081 = vmatprep.subr.mxu0 %v1047
    %1082 = vmatpush1.msra.mxu0 %v1046
    %1083 = vmatprep.subr.mxu0 %v1045
    %1084 = vmatpush1.msra.mxu0 %v1044
    %1085 = vmatprep.subr.mxu0 %v1043
    %1086 = vmatpush1.msra.mxu0 %v1042
    %1087 = vmatprep.subr.mxu0 0.0
    %1088 = vmatpush2.msra.mxu0 0.0
    %1089 = vmatprep.subr.mxu0 0.0
    %1090 = vmatpush2.msra.mxu0 0.0
    %1091 = vmatprep.subr.mxu0 0.0
    %1092 = vmatpush2.msra.mxu0 0.0
    %1093 = vmatprep.subr.mxu0 0.0
    %1094 = vmatpush2.msra.mxu0 0.0
    %1095 = vmatprep.subr.mxu0 0.0
    %1096 = vmatpush2.msra.mxu0 0.0
    %1097 = vmatprep.subr.mxu0 0.0
    %1098 = vmatpush2.msra.mxu0 0.0
    %1099 = vmatprep.subr.mxu0 0.0
    %1100 = vmatpush2.msra.mxu0 0.0
    %1101 = vmatprep.subr.mxu0 0.0
    %1102 = vmatpush2.msra.mxu0 0.0
    %1103 = vmatprep.subr.mxu0 0.0
    %1104 = vmatpush2.msra.mxu0 0.0
    %1105 = vmatprep.subr.mxu0 0.0
    %1106 = vmatpush2.msra.mxu0 0.0
    %1107 = vmatprep.subr.mxu0 0.0
    %1108 = vmatpush2.msra.mxu0 0.0
    %1109 = vmatprep.subr.mxu0 0.0
    %1110 = vmatpush2.msra.mxu0 0.0
    %1111 = vmatprep.subr.mxu0 0.0
    %1112 = vmatpush2.msra.mxu0 0.0
    %1113 = vmatprep.subr.mxu0 0.0
    %1114 = vmatpush2.msra.mxu0 0.0
    %1115 = vmatprep.subr.mxu0 0.0
    %1116 = vmatpush2.msra.mxu0 0.0
    %1117 = vmatprep.subr.mxu0 0.0
    %1118 = vmatpush2.msra.mxu0 0.0
    %1119 = vmatprep.mubr.f32.mxu0 0.0
    %1120 = vmatmul.mubr.f32.gmra.mxu0 %v1053
    %v1121 = vpop.f32.mrf.mxu0
    %v1122 = vadd.f32 0.0, %v1121
    %v1123 = vpop.f32.mrf.mxu0
    %v1124 = vadd.f32 0.0, %v1123
    %1125 = vdwg.mxu0
    %v1126 = vadd.f32 %v941, %v1122
    %v1127 = vadd.f32 %v942, %v1124
    %s1128 = scalar_lea.vmem [#allocation2], 32
    %v1129 = vld [vmem:[%s1128] sm:$0xff]
    %1130 = vmatprep.subr.mxu0 0.0
    %1131 = vmatpush1.msra.mxu0 0.0
    %1132 = vmatprep.subr.mxu0 0.0
    %1133 = vmatpush1.msra.mxu0 0.0
    %1134 = vmatprep.subr.mxu0 0.0
    %1135 = vmatpush1.msra.mxu0 0.0
    %1136 = vmatprep.subr.mxu0 0.0
    %1137 = vmatpush1.msra.mxu0 0.0
    %1138 = vmatprep.subr.mxu0 0.0
    %1139 = vmatpush1.msra.mxu0 0.0
    %1140 = vmatprep.subr.mxu0 0.0
    %1141 = vmatpush1.msra.mxu0 0.0
    %1142 = vmatprep.subr.mxu0 0.0
    %1143 = vmatpush1.msra.mxu0 0.0
    %1144 = vmatprep.subr.mxu0 0.0
    %1145 = vmatpush1.msra.mxu0 0.0
    %1146 = vmatprep.subr.mxu0 0.0
    %1147 = vmatpush1.msra.mxu0 0.0
    %1148 = vmatprep.subr.mxu0 0.0
    %1149 = vmatpush1.msra.mxu0 0.0
    %1150 = vmatprep.subr.mxu0 0.0
    %1151 = vmatpush1.msra.mxu0 0.0
    %1152 = vmatprep.subr.mxu0 0.0
    %1153 = vmatpush1.msra.mxu0 0.0
    %1154 = vmatprep.subr.mxu0 0.0
    %1155 = vmatpush1.msra.mxu0 %v382
    %1156 = vmatprep.subr.mxu0 0.0
    %1157 = vmatpush1.msra.mxu0 %v381
    %1158 = vmatprep.subr.mxu0 0.0
    %1159 = vmatpush1.msra.mxu0 %v380
    %1160 = vmatprep.subr.mxu0 0.0
    %1161 = vmatpush1.msra.mxu0 %v379
    %1162 = vmatprep.subr.mxu0 0.0
    %1163 = vmatpush2.msra.mxu0 0.0
    %1164 = vmatprep.subr.mxu0 0.0
    %1165 = vmatpush2.msra.mxu0 0.0
    %1166 = vmatprep.subr.mxu0 0.0
    %1167 = vmatpush2.msra.mxu0 0.0
    %1168 = vmatprep.subr.mxu0 0.0
    %1169 = vmatpush2.msra.mxu0 0.0
    %1170 = vmatprep.subr.mxu0 0.0
    %1171 = vmatpush2.msra.mxu0 0.0
    %1172 = vmatprep.subr.mxu0 0.0
    %1173 = vmatpush2.msra.mxu0 0.0
    %1174 = vmatprep.subr.mxu0 0.0
    %1175 = vmatpush2.msra.mxu0 0.0
    %1176 = vmatprep.subr.mxu0 0.0
    %1177 = vmatpush2.msra.mxu0 0.0
    %1178 = vmatprep.subr.mxu0 0.0
    %1179 = vmatpush2.msra.mxu0 0.0
    %1180 = vmatprep.subr.mxu0 0.0
    %1181 = vmatpush2.msra.mxu0 0.0
    %1182 = vmatprep.subr.mxu0 0.0
    %1183 = vmatpush2.msra.mxu0 0.0
    %1184 = vmatprep.subr.mxu0 0.0
    %1185 = vmatpush2.msra.mxu0 0.0
    %1186 = vmatprep.subr.mxu0 0.0
    %1187 = vmatpush2.msra.mxu0 0.0
    %1188 = vmatprep.subr.mxu0 0.0
    %1189 = vmatpush2.msra.mxu0 0.0
    %1190 = vmatprep.subr.mxu0 0.0
    %1191 = vmatpush2.msra.mxu0 0.0
    %1192 = vmatprep.subr.mxu0 0.0
    %1193 = vmatpush2.msra.mxu0 0.0
    %1194 = vmatprep.mubr.f32.mxu0 0.0
    %1195 = vmatmul.mubr.f32.gmra.mxu0 %v1053
    %v1196 = vpop.f32.mrf.mxu0
    %v1197 = vadd.f32 %v387, %v1196
    %v1198 = vpop.f32.mrf.mxu0
    %1199 = vdwg.mxu0
    %v1200 = vadd.f32 %v1129, %v1197
    %v1201 = vxor.u32 %v1200, 2147483648
    %v1202 = vmul.f32 %v1201, 1.442695
    %v1203 = vpow.pop %v1202
    %v1204 = vadd.f32 %v1203, 1.0
    %v1205 = vrcp.pop %v1204
    %v1206 = vmul.f32 1.0, %v1205
    %1208 = vrot.lane.b32.xlu0 %v1197, 64
    %v1209 = vpop.permute.xlu0 %1208
    %v1211 = vmul.f32 %v1206, %v1209
    %1213 = vrot.lane.b32.xlu0 %v1211, 64
    %v1214 = vpop.permute.xlu0 %1213
    %v1216 = vadd.f32 %v1129, %v1214
    %v1217 = vtanh.pop %v1216
    %v1218 = vsub.f32 1.0, %v1206
    %1220 = vrot.lane.b32.xlu0 %v1217, 96
    %v1221 = vpop.permute.xlu0 %1220
    %v1223 = vmul.f32 %v1218, %v1221
    %v1224 = vmul.f32 %v1206, %v1040
    %v1225 = vadd.f32 %v1223, %v1224
    %s1226 = scalar_lea.vmem [#allocation3], 256
    %v1227 = vld [vmem:[%s1226] sm:$0xff]
    %v1228 = vld [vmem:[%s1226 + $0x8] sm:$0xff]
    %v1229 = vld [vmem:[%s1226 + $0x10] sm:$0xff]
    %v1230 = vld [vmem:[%s1226 + $0x18] sm:$0xff]
    %v1231 = vld [vmem:[%s1226 + $0x20] sm:$0xff]
    %v1232 = vld [vmem:[%s1226 + $0x28] sm:$0xff]
    %v1233 = vld [vmem:[%s1226 + $0x30] sm:$0xff]
    %v1234 = vld [vmem:[%s1226 + $0x38] sm:$0xff]
    %1236 = vrot.lane.b32.xlu0 %v1225, 96
    %v1237 = vpop.permute.xlu0 %1236
    %v1238 = vsel %vm227, %v1237, 0
    %1240 = vmatprep.subr.mxu0 0.0
    %1241 = vmatpush1.msra.mxu0 0.0
    %1242 = vmatprep.subr.mxu0 0.0
    %1243 = vmatpush1.msra.mxu0 0.0
    %1244 = vmatprep.subr.mxu0 0.0
    %1245 = vmatpush1.msra.mxu0 0.0
    %1246 = vmatprep.subr.mxu0 0.0
    %1247 = vmatpush1.msra.mxu0 0.0
    %1248 = vmatprep.subr.mxu0 0.0
    %1249 = vmatpush1.msra.mxu0 0.0
    %1250 = vmatprep.subr.mxu0 0.0
    %1251 = vmatpush1.msra.mxu0 0.0
    %1252 = vmatprep.subr.mxu0 0.0
    %1253 = vmatpush1.msra.mxu0 0.0
    %1254 = vmatprep.subr.mxu0 0.0
    %1255 = vmatpush1.msra.mxu0 0.0
    %1256 = vmatprep.subr.mxu0 0.0
    %1257 = vmatpush1.msra.mxu0 0.0
    %1258 = vmatprep.subr.mxu0 0.0
    %1259 = vmatpush1.msra.mxu0 0.0
    %1260 = vmatprep.subr.mxu0 0.0
    %1261 = vmatpush1.msra.mxu0 0.0
    %1262 = vmatprep.subr.mxu0 0.0
    %1263 = vmatpush1.msra.mxu0 0.0
    %1264 = vmatprep.subr.mxu0 %v1234
    %1265 = vmatpush1.msra.mxu0 %v1233
    %1266 = vmatprep.subr.mxu0 %v1232
    %1267 = vmatpush1.msra.mxu0 %v1231
    %1268 = vmatprep.subr.mxu0 %v1230
    %1269 = vmatpush1.msra.mxu0 %v1229
    %1270 = vmatprep.subr.mxu0 %v1228
    %1271 = vmatpush1.msra.mxu0 %v1227
    %1272 = vmatprep.subr.mxu0 0.0
    %1273 = vmatpush2.msra.mxu0 0.0
    %1274 = vmatprep.subr.mxu0 0.0
    %1275 = vmatpush2.msra.mxu0 0.0
    %1276 = vmatprep.subr.mxu0 0.0
    %1277 = vmatpush2.msra.mxu0 0.0
    %1278 = vmatprep.subr.mxu0 0.0
    %1279 = vmatpush2.msra.mxu0 0.0
    %1280 = vmatprep.subr.mxu0 0.0
    %1281 = vmatpush2.msra.mxu0 0.0
    %1282 = vmatprep.subr.mxu0 0.0
    %1283 = vmatpush2.msra.mxu0 0.0
    %1284 = vmatprep.subr.mxu0 0.0
    %1285 = vmatpush2.msra.mxu0 0.0
    %1286 = vmatprep.subr.mxu0 0.0
    %1287 = vmatpush2.msra.mxu0 0.0
    %1288 = vmatprep.subr.mxu0 0.0
    %1289 = vmatpush2.msra.mxu0 0.0
    %1290 = vmatprep.subr.mxu0 0.0
    %1291 = vmatpush2.msra.mxu0 0.0
    %1292 = vmatprep.subr.mxu0 0.0
    %1293 = vmatpush2.msra.mxu0 0.0
    %1294 = vmatprep.subr.mxu0 0.0
    %1295 = vmatpush2.msra.mxu0 0.0
    %1296 = vmatprep.subr.mxu0 0.0
    %1297 = vmatpush2.msra.mxu0 0.0
    %1298 = vmatprep.subr.mxu0 0.0
    %1299 = vmatpush2.msra.mxu0 0.0
    %1300 = vmatprep.subr.mxu0 0.0
    %1301 = vmatpush2.msra.mxu0 0.0
    %1302 = vmatprep.subr.mxu0 0.0
    %1303 = vmatpush2.msra.mxu0 0.0
    %1304 = vmatprep.mubr.f32.mxu0 0.0
    %1305 = vmatmul.mubr.f32.gmra.mxu0 %v1238
    %v1306 = vpop.f32.mrf.mxu0
    %v1307 = vadd.f32 0.0, %v1306
    %v1308 = vpop.f32.mrf.mxu0
    %v1309 = vadd.f32 0.0, %v1308
    %1310 = vdwg.mxu0
    %v1311 = vadd.f32 %v1126, %v1307
    %v1312 = vadd.f32 %v1127, %v1309
    %s1313 = scalar_lea.vmem [#allocation2], 40
    %v1314 = vld [vmem:[%s1313] sm:$0xff]
    %1315 = vmatprep.subr.mxu0 0.0
    %1316 = vmatpush1.msra.mxu0 0.0
    %1317 = vmatprep.subr.mxu0 0.0
    %1318 = vmatpush1.msra.mxu0 0.0
    %1319 = vmatprep.subr.mxu0 0.0
    %1320 = vmatpush1.msra.mxu0 0.0
    %1321 = vmatprep.subr.mxu0 0.0
    %1322 = vmatpush1.msra.mxu0 0.0
    %1323 = vmatprep.subr.mxu0 0.0
    %1324 = vmatpush1.msra.mxu0 0.0
    %1325 = vmatprep.subr.mxu0 0.0
    %1326 = vmatpush1.msra.mxu0 0.0
    %1327 = vmatprep.subr.mxu0 0.0
    %1328 = vmatpush1.msra.mxu0 0.0
    %1329 = vmatprep.subr.mxu0 0.0
    %1330 = vmatpush1.msra.mxu0 0.0
    %1331 = vmatprep.subr.mxu0 0.0
    %1332 = vmatpush1.msra.mxu0 0.0
    %1333 = vmatprep.subr.mxu0 0.0
    %1334 = vmatpush1.msra.mxu0 0.0
    %1335 = vmatprep.subr.mxu0 0.0
    %1336 = vmatpush1.msra.mxu0 0.0
    %1337 = vmatprep.subr.mxu0 0.0
    %1338 = vmatpush1.msra.mxu0 0.0
    %1339 = vmatprep.subr.mxu0 0.0
    %1340 = vmatpush1.msra.mxu0 %v382
    %1341 = vmatprep.subr.mxu0 0.0
    %1342 = vmatpush1.msra.mxu0 %v381
    %1343 = vmatprep.subr.mxu0 0.0
    %1344 = vmatpush1.msra.mxu0 %v380
    %1345 = vmatprep.subr.mxu0 0.0
    %1346 = vmatpush1.msra.mxu0 %v379
    %1347 = vmatprep.subr.mxu0 0.0
    %1348 = vmatpush2.msra.mxu0 0.0
    %1349 = vmatprep.subr.mxu0 0.0
    %1350 = vmatpush2.msra.mxu0 0.0
    %1351 = vmatprep.subr.mxu0 0.0
    %1352 = vmatpush2.msra.mxu0 0.0
    %1353 = vmatprep.subr.mxu0 0.0
    %1354 = vmatpush2.msra.mxu0 0.0
    %1355 = vmatprep.subr.mxu0 0.0
    %1356 = vmatpush2.msra.mxu0 0.0
    %1357 = vmatprep.subr.mxu0 0.0
    %1358 = vmatpush2.msra.mxu0 0.0
    %1359 = vmatprep.subr.mxu0 0.0
    %1360 = vmatpush2.msra.mxu0 0.0
    %1361 = vmatprep.subr.mxu0 0.0
    %1362 = vmatpush2.msra.mxu0 0.0
    %1363 = vmatprep.subr.mxu0 0.0
    %1364 = vmatpush2.msra.mxu0 0.0
    %1365 = vmatprep.subr.mxu0 0.0
    %1366 = vmatpush2.msra.mxu0 0.0
    %1367 = vmatprep.subr.mxu0 0.0
    %1368 = vmatpush2.msra.mxu0 0.0
    %1369 = vmatprep.subr.mxu0 0.0
    %1370 = vmatpush2.msra.mxu0 0.0
    %1371 = vmatprep.subr.mxu0 0.0
    %1372 = vmatpush2.msra.mxu0 0.0
    %1373 = vmatprep.subr.mxu0 0.0
    %1374 = vmatpush2.msra.mxu0 0.0
    %1375 = vmatprep.subr.mxu0 0.0
    %1376 = vmatpush2.msra.mxu0 0.0
    %1377 = vmatprep.subr.mxu0 0.0
    %1378 = vmatpush2.msra.mxu0 0.0
    %1379 = vmatprep.mubr.f32.mxu0 0.0
    %1380 = vmatmul.mubr.f32.gmra.mxu0 %v1238
    %v1381 = vpop.f32.mrf.mxu0
    %v1382 = vadd.f32 %v387, %v1381
    %v1383 = vpop.f32.mrf.mxu0
    %1384 = vdwg.mxu0
    %v1385 = vadd.f32 %v1314, %v1382
    %v1386 = vxor.u32 %v1385, 2147483648
    %v1387 = vmul.f32 %v1386, 1.442695
    %v1388 = vpow.pop %v1387
    %v1389 = vadd.f32 %v1388, 1.0
    %v1390 = vrcp.pop %v1389
    %v1391 = vmul.f32 1.0, %v1390
    %1393 = vrot.lane.b32.xlu0 %v1382, 64
    %v1394 = vpop.permute.xlu0 %1393
    %v1396 = vmul.f32 %v1391, %v1394
    %1398 = vrot.lane.b32.xlu0 %v1396, 64
    %v1399 = vpop.permute.xlu0 %1398
    %v1401 = vadd.f32 %v1314, %v1399
    %v1402 = vtanh.pop %v1401
    %v1403 = vsub.f32 1.0, %v1391
    %1405 = vrot.lane.b32.xlu0 %v1402, 96
    %v1406 = vpop.permute.xlu0 %1405
    %v1408 = vmul.f32 %v1403, %v1406
    %v1409 = vmul.f32 %v1391, %v1225
    %v1410 = vadd.f32 %v1408, %v1409
    %s1411 = scalar_lea.vmem [#allocation3], 320
    %v1412 = vld [vmem:[%s1411] sm:$0xff]
    %v1413 = vld [vmem:[%s1411 + $0x8] sm:$0xff]
    %v1414 = vld [vmem:[%s1411 + $0x10] sm:$0xff]
    %v1415 = vld [vmem:[%s1411 + $0x18] sm:$0xff]
    %v1416 = vld [vmem:[%s1411 + $0x20] sm:$0xff]
    %v1417 = vld [vmem:[%s1411 + $0x28] sm:$0xff]
    %v1418 = vld [vmem:[%s1411 + $0x30] sm:$0xff]
    %v1419 = vld [vmem:[%s1411 + $0x38] sm:$0xff]
    %1421 = vrot.lane.b32.xlu0 %v1410, 96
    %v1422 = vpop.permute.xlu0 %1421
    %v1423 = vsel %vm227, %v1422, 0
    %1425 = vmatprep.subr.mxu0 0.0
    %1426 = vmatpush1.msra.mxu0 0.0
    %1427 = vmatprep.subr.mxu0 0.0
    %1428 = vmatpush1.msra.mxu0 0.0
    %1429 = vmatprep.subr.mxu0 0.0
    %1430 = vmatpush1.msra.mxu0 0.0
    %1431 = vmatprep.subr.mxu0 0.0
    %1432 = vmatpush1.msra.mxu0 0.0
    %1433 = vmatprep.subr.mxu0 0.0
    %1434 = vmatpush1.msra.mxu0 0.0
    %1435 = vmatprep.subr.mxu0 0.0
    %1436 = vmatpush1.msra.mxu0 0.0
    %1437 = vmatprep.subr.mxu0 0.0
    %1438 = vmatpush1.msra.mxu0 0.0
    %1439 = vmatprep.subr.mxu0 0.0
    %1440 = vmatpush1.msra.mxu0 0.0
    %1441 = vmatprep.subr.mxu0 0.0
    %1442 = vmatpush1.msra.mxu0 0.0
    %1443 = vmatprep.subr.mxu0 0.0
    %1444 = vmatpush1.msra.mxu0 0.0
    %1445 = vmatprep.subr.mxu0 0.0
    %1446 = vmatpush1.msra.mxu0 0.0
    %1447 = vmatprep.subr.mxu0 0.0
    %1448 = vmatpush1.msra.mxu0 0.0
    %1449 = vmatprep.subr.mxu0 %v1419
    %1450 = vmatpush1.msra.mxu0 %v1418
    %1451 = vmatprep.subr.mxu0 %v1417
    %1452 = vmatpush1.msra.mxu0 %v1416
    %1453 = vmatprep.subr.mxu0 %v1415
    %1454 = vmatpush1.msra.mxu0 %v1414
    %1455 = vmatprep.subr.mxu0 %v1413
    %1456 = vmatpush1.msra.mxu0 %v1412
    %1457 = vmatprep.subr.mxu0 0.0
    %1458 = vmatpush2.msra.mxu0 0.0
    %1459 = vmatprep.subr.mxu0 0.0
    %1460 = vmatpush2.msra.mxu0 0.0
    %1461 = vmatprep.subr.mxu0 0.0
    %1462 = vmatpush2.msra.mxu0 0.0
    %1463 = vmatprep.subr.mxu0 0.0
    %1464 = vmatpush2.msra.mxu0 0.0
    %1465 = vmatprep.subr.mxu0 0.0
    %1466 = vmatpush2.msra.mxu0 0.0
    %1467 = vmatprep.subr.mxu0 0.0
    %1468 = vmatpush2.msra.mxu0 0.0
    %1469 = vmatprep.subr.mxu0 0.0
    %1470 = vmatpush2.msra.mxu0 0.0
    %1471 = vmatprep.subr.mxu0 0.0
    %1472 = vmatpush2.msra.mxu0 0.0
    %1473 = vmatprep.subr.mxu0 0.0
    %1474 = vmatpush2.msra.mxu0 0.0
    %1475 = vmatprep.subr.mxu0 0.0
    %1476 = vmatpush2.msra.mxu0 0.0
    %1477 = vmatprep.subr.mxu0 0.0
    %1478 = vmatpush2.msra.mxu0 0.0
    %1479 = vmatprep.subr.mxu0 0.0
    %1480 = vmatpush2.msra.mxu0 0.0
    %1481 = vmatprep.subr.mxu0 0.0
    %1482 = vmatpush2.msra.mxu0 0.0
    %1483 = vmatprep.subr.mxu0 0.0
    %1484 = vmatpush2.msra.mxu0 0.0
    %1485 = vmatprep.subr.mxu0 0.0
    %1486 = vmatpush2.msra.mxu0 0.0
    %1487 = vmatprep.subr.mxu0 0.0
    %1488 = vmatpush2.msra.mxu0 0.0
    %1489 = vmatprep.mubr.f32.mxu0 0.0
    %1490 = vmatmul.mubr.f32.gmra.mxu0 %v1423
    %v1491 = vpop.f32.mrf.mxu0
    %v1492 = vadd.f32 0.0, %v1491
    %v1493 = vpop.f32.mrf.mxu0
    %v1494 = vadd.f32 0.0, %v1493
    %1495 = vdwg.mxu0
    %v1496 = vadd.f32 %v1311, %v1492
    %v1497 = vadd.f32 %v1312, %v1494
    %s1498 = scalar_lea.vmem [#allocation2], 48
    %v1499 = vld [vmem:[%s1498] sm:$0xff]
    %1500 = vmatprep.subr.mxu0 0.0
    %1501 = vmatpush1.msra.mxu0 0.0
    %1502 = vmatprep.subr.mxu0 0.0
    %1503 = vmatpush1.msra.mxu0 0.0
    %1504 = vmatprep.subr.mxu0 0.0
    %1505 = vmatpush1.msra.mxu0 0.0
    %1506 = vmatprep.subr.mxu0 0.0
    %1507 = vmatpush1.msra.mxu0 0.0
    %1508 = vmatprep.subr.mxu0 0.0
    %1509 = vmatpush1.msra.mxu0 0.0
    %1510 = vmatprep.subr.mxu0 0.0
    %1511 = vmatpush1.msra.mxu0 0.0
    %1512 = vmatprep.subr.mxu0 0.0
    %1513 = vmatpush1.msra.mxu0 0.0
    %1514 = vmatprep.subr.mxu0 0.0
    %1515 = vmatpush1.msra.mxu0 0.0
    %1516 = vmatprep.subr.mxu0 0.0
    %1517 = vmatpush1.msra.mxu0 0.0
    %1518 = vmatprep.subr.mxu0 0.0
    %1519 = vmatpush1.msra.mxu0 0.0
    %1520 = vmatprep.subr.mxu0 0.0
    %1521 = vmatpush1.msra.mxu0 0.0
    %1522 = vmatprep.subr.mxu0 0.0
    %1523 = vmatpush1.msra.mxu0 0.0
    %1524 = vmatprep.subr.mxu0 0.0
    %1525 = vmatpush1.msra.mxu0 %v382
    %1526 = vmatprep.subr.mxu0 0.0
    %1527 = vmatpush1.msra.mxu0 %v381
    %1528 = vmatprep.subr.mxu0 0.0
    %1529 = vmatpush1.msra.mxu0 %v380
    %1530 = vmatprep.subr.mxu0 0.0
    %1531 = vmatpush1.msra.mxu0 %v379
    %1532 = vmatprep.subr.mxu0 0.0
    %1533 = vmatpush2.msra.mxu0 0.0
    %1534 = vmatprep.subr.mxu0 0.0
    %1535 = vmatpush2.msra.mxu0 0.0
    %1536 = vmatprep.subr.mxu0 0.0
    %1537 = vmatpush2.msra.mxu0 0.0
    %1538 = vmatprep.subr.mxu0 0.0
    %1539 = vmatpush2.msra.mxu0 0.0
    %1540 = vmatprep.subr.mxu0 0.0
    %1541 = vmatpush2.msra.mxu0 0.0
    %1542 = vmatprep.subr.mxu0 0.0
    %1543 = vmatpush2.msra.mxu0 0.0
    %1544 = vmatprep.subr.mxu0 0.0
    %1545 = vmatpush2.msra.mxu0 0.0
    %1546 = vmatprep.subr.mxu0 0.0
    %1547 = vmatpush2.msra.mxu0 0.0
    %1548 = vmatprep.subr.mxu0 0.0
    %1549 = vmatpush2.msra.mxu0 0.0
    %1550 = vmatprep.subr.mxu0 0.0
    %1551 = vmatpush2.msra.mxu0 0.0
    %1552 = vmatprep.subr.mxu0 0.0
    %1553 = vmatpush2.msra.mxu0 0.0
    %1554 = vmatprep.subr.mxu0 0.0
    %1555 = vmatpush2.msra.mxu0 0.0
    %1556 = vmatprep.subr.mxu0 0.0
    %1557 = vmatpush2.msra.mxu0 0.0
    %1558 = vmatprep.subr.mxu0 0.0
    %1559 = vmatpush2.msra.mxu0 0.0
    %1560 = vmatprep.subr.mxu0 0.0
    %1561 = vmatpush2.msra.mxu0 0.0
    %1562 = vmatprep.subr.mxu0 0.0
    %1563 = vmatpush2.msra.mxu0 0.0
    %1564 = vmatprep.mubr.f32.mxu0 0.0
    %1565 = vmatmul.mubr.f32.gmra.mxu0 %v1423
    %v1566 = vpop.f32.mrf.mxu0
    %v1567 = vadd.f32 %v387, %v1566
    %v1568 = vpop.f32.mrf.mxu0
    %1569 = vdwg.mxu0
    %v1570 = vadd.f32 %v1499, %v1567
    %v1571 = vxor.u32 %v1570, 2147483648
    %v1572 = vmul.f32 %v1571, 1.442695
    %v1573 = vpow.pop %v1572
    %v1574 = vadd.f32 %v1573, 1.0
    %v1575 = vrcp.pop %v1574
    %v1576 = vmul.f32 1.0, %v1575
    %1578 = vrot.lane.b32.xlu0 %v1567, 64
    %v1579 = vpop.permute.xlu0 %1578
    %v1581 = vmul.f32 %v1576, %v1579
    %1583 = vrot.lane.b32.xlu0 %v1581, 64
    %v1584 = vpop.permute.xlu0 %1583
    %v1586 = vadd.f32 %v1499, %v1584
    %v1587 = vtanh.pop %v1586
    %v1588 = vsub.f32 1.0, %v1576
    %1590 = vrot.lane.b32.xlu0 %v1587, 96
    %v1591 = vpop.permute.xlu0 %1590
    %v1593 = vmul.f32 %v1588, %v1591
    %v1594 = vmul.f32 %v1576, %v1410
    %v1595 = vadd.f32 %v1593, %v1594
    %s1596 = scalar_lea.vmem [#allocation3], 384
    %v1597 = vld [vmem:[%s1596] sm:$0xff]
    %v1598 = vld [vmem:[%s1596 + $0x8] sm:$0xff]
    %v1599 = vld [vmem:[%s1596 + $0x10] sm:$0xff]
    %v1600 = vld [vmem:[%s1596 + $0x18] sm:$0xff]
    %v1601 = vld [vmem:[%s1596 + $0x20] sm:$0xff]
    %v1602 = vld [vmem:[%s1596 + $0x28] sm:$0xff]
    %v1603 = vld [vmem:[%s1596 + $0x30] sm:$0xff]
    %v1604 = vld [vmem:[%s1596 + $0x38] sm:$0xff]
    %1606 = vrot.lane.b32.xlu0 %v1595, 96
    %v1607 = vpop.permute.xlu0 %1606
    %v1608 = vsel %vm227, %v1607, 0
    %1610 = vmatprep.subr.mxu0 0.0
    %1611 = vmatpush1.msra.mxu0 0.0
    %1612 = vmatprep.subr.mxu0 0.0
    %1613 = vmatpush1.msra.mxu0 0.0
    %1614 = vmatprep.subr.mxu0 0.0
    %1615 = vmatpush1.msra.mxu0 0.0
    %1616 = vmatprep.subr.mxu0 0.0
    %1617 = vmatpush1.msra.mxu0 0.0
    %1618 = vmatprep.subr.mxu0 0.0
    %1619 = vmatpush1.msra.mxu0 0.0
    %1620 = vmatprep.subr.mxu0 0.0
    %1621 = vmatpush1.msra.mxu0 0.0
    %1622 = vmatprep.subr.mxu0 0.0
    %1623 = vmatpush1.msra.mxu0 0.0
    %1624 = vmatprep.subr.mxu0 0.0
    %1625 = vmatpush1.msra.mxu0 0.0
    %1626 = vmatprep.subr.mxu0 0.0
    %1627 = vmatpush1.msra.mxu0 0.0
    %1628 = vmatprep.subr.mxu0 0.0
    %1629 = vmatpush1.msra.mxu0 0.0
    %1630 = vmatprep.subr.mxu0 0.0
    %1631 = vmatpush1.msra.mxu0 0.0
    %1632 = vmatprep.subr.mxu0 0.0
    %1633 = vmatpush1.msra.mxu0 0.0
    %1634 = vmatprep.subr.mxu0 %v1604
    %1635 = vmatpush1.msra.mxu0 %v1603
    %1636 = vmatprep.subr.mxu0 %v1602
    %1637 = vmatpush1.msra.mxu0 %v1601
    %1638 = vmatprep.subr.mxu0 %v1600
    %1639 = vmatpush1.msra.mxu0 %v1599
    %1640 = vmatprep.subr.mxu0 %v1598
    %1641 = vmatpush1.msra.mxu0 %v1597
    %1642 = vmatprep.subr.mxu0 0.0
    %1643 = vmatpush2.msra.mxu0 0.0
    %1644 = vmatprep.subr.mxu0 0.0
    %1645 = vmatpush2.msra.mxu0 0.0
    %1646 = vmatprep.subr.mxu0 0.0
    %1647 = vmatpush2.msra.mxu0 0.0
    %1648 = vmatprep.subr.mxu0 0.0
    %1649 = vmatpush2.msra.mxu0 0.0
    %1650 = vmatprep.subr.mxu0 0.0
    %1651 = vmatpush2.msra.mxu0 0.0
    %1652 = vmatprep.subr.mxu0 0.0
    %1653 = vmatpush2.msra.mxu0 0.0
    %1654 = vmatprep.subr.mxu0 0.0
    %1655 = vmatpush2.msra.mxu0 0.0
    %1656 = vmatprep.subr.mxu0 0.0
    %1657 = vmatpush2.msra.mxu0 0.0
    %1658 = vmatprep.subr.mxu0 0.0
    %1659 = vmatpush2.msra.mxu0 0.0
    %1660 = vmatprep.subr.mxu0 0.0
    %1661 = vmatpush2.msra.mxu0 0.0
    %1662 = vmatprep.subr.mxu0 0.0
    %1663 = vmatpush2.msra.mxu0 0.0
    %1664 = vmatprep.subr.mxu0 0.0
    %1665 = vmatpush2.msra.mxu0 0.0
    %1666 = vmatprep.subr.mxu0 0.0
    %1667 = vmatpush2.msra.mxu0 0.0
    %1668 = vmatprep.subr.mxu0 0.0
    %1669 = vmatpush2.msra.mxu0 0.0
    %1670 = vmatprep.subr.mxu0 0.0
    %1671 = vmatpush2.msra.mxu0 0.0
    %1672 = vmatprep.subr.mxu0 0.0
    %1673 = vmatpush2.msra.mxu0 0.0
    %1674 = vmatprep.mubr.f32.mxu0 0.0
    %1675 = vmatmul.mubr.f32.gmra.mxu0 %v1608
    %v1676 = vpop.f32.mrf.mxu0
    %v1677 = vadd.f32 0.0, %v1676
    %v1678 = vpop.f32.mrf.mxu0
    %v1679 = vadd.f32 0.0, %v1678
    %1680 = vdwg.mxu0
    %v1681 = vadd.f32 %v1496, %v1677
    %v1682 = vadd.f32 %v1497, %v1679
    %s1683 = scalar_lea.vmem [#allocation2], 56
    %v1684 = vld [vmem:[%s1683] sm:$0xff]
    %1685 = vmatprep.subr.mxu0 0.0
    %1686 = vmatpush1.msra.mxu0 0.0
    %1687 = vmatprep.subr.mxu0 0.0
    %1688 = vmatpush1.msra.mxu0 0.0
    %1689 = vmatprep.subr.mxu0 0.0
    %1690 = vmatpush1.msra.mxu0 0.0
    %1691 = vmatprep.subr.mxu0 0.0
    %1692 = vmatpush1.msra.mxu0 0.0
    %1693 = vmatprep.subr.mxu0 0.0
    %1694 = vmatpush1.msra.mxu0 0.0
    %1695 = vmatprep.subr.mxu0 0.0
    %1696 = vmatpush1.msra.mxu0 0.0
    %1697 = vmatprep.subr.mxu0 0.0
    %1698 = vmatpush1.msra.mxu0 0.0
    %1699 = vmatprep.subr.mxu0 0.0
    %1700 = vmatpush1.msra.mxu0 0.0
    %1701 = vmatprep.subr.mxu0 0.0
    %1702 = vmatpush1.msra.mxu0 0.0
    %1703 = vmatprep.subr.mxu0 0.0
    %1704 = vmatpush1.msra.mxu0 0.0
    %1705 = vmatprep.subr.mxu0 0.0
    %1706 = vmatpush1.msra.mxu0 0.0
    %1707 = vmatprep.subr.mxu0 0.0
    %1708 = vmatpush1.msra.mxu0 0.0
    %1709 = vmatprep.subr.mxu0 0.0
    %1710 = vmatpush1.msra.mxu0 %v382
    %1711 = vmatprep.subr.mxu0 0.0
    %1712 = vmatpush1.msra.mxu0 %v381
    %1713 = vmatprep.subr.mxu0 0.0
    %1714 = vmatpush1.msra.mxu0 %v380
    %1715 = vmatprep.subr.mxu0 0.0
    %1716 = vmatpush1.msra.mxu0 %v379
    %1717 = vmatprep.subr.mxu0 0.0
    %1718 = vmatpush2.msra.mxu0 0.0
    %1719 = vmatprep.subr.mxu0 0.0
    %1720 = vmatpush2.msra.mxu0 0.0
    %1721 = vmatprep.subr.mxu0 0.0
    %1722 = vmatpush2.msra.mxu0 0.0
    %1723 = vmatprep.subr.mxu0 0.0
    %1724 = vmatpush2.msra.mxu0 0.0
    %1725 = vmatprep.subr.mxu0 0.0
    %1726 = vmatpush2.msra.mxu0 0.0
    %1727 = vmatprep.subr.mxu0 0.0
    %1728 = vmatpush2.msra.mxu0 0.0
    %1729 = vmatprep.subr.mxu0 0.0
    %1730 = vmatpush2.msra.mxu0 0.0
    %1731 = vmatprep.subr.mxu0 0.0
    %1732 = vmatpush2.msra.mxu0 0.0
    %1733 = vmatprep.subr.mxu0 0.0
    %1734 = vmatpush2.msra.mxu0 0.0
    %1735 = vmatprep.subr.mxu0 0.0
    %1736 = vmatpush2.msra.mxu0 0.0
    %1737 = vmatprep.subr.mxu0 0.0
    %1738 = vmatpush2.msra.mxu0 0.0
    %1739 = vmatprep.subr.mxu0 0.0
    %1740 = vmatpush2.msra.mxu0 0.0
    %1741 = vmatprep.subr.mxu0 0.0
    %1742 = vmatpush2.msra.mxu0 0.0
    %1743 = vmatprep.subr.mxu0 0.0
    %1744 = vmatpush2.msra.mxu0 0.0
    %1745 = vmatprep.subr.mxu0 0.0
    %1746 = vmatpush2.msra.mxu0 0.0
    %1747 = vmatprep.subr.mxu0 0.0
    %1748 = vmatpush2.msra.mxu0 0.0
    %1749 = vmatprep.mubr.f32.mxu0 0.0
    %1750 = vmatmul.mubr.f32.gmra.mxu0 %v1608
    %v1751 = vpop.f32.mrf.mxu0
    %v1752 = vadd.f32 %v387, %v1751
    %v1753 = vpop.f32.mrf.mxu0
    %1754 = vdwg.mxu0
    %v1755 = vadd.f32 %v1684, %v1752
    %v1756 = vxor.u32 %v1755, 2147483648
    %v1757 = vmul.f32 %v1756, 1.442695
    %v1758 = vpow.pop %v1757
    %v1759 = vadd.f32 %v1758, 1.0
    %v1760 = vrcp.pop %v1759
    %v1761 = vmul.f32 1.0, %v1760
    %1763 = vrot.lane.b32.xlu0 %v1752, 64
    %v1764 = vpop.permute.xlu0 %1763
    %v1766 = vmul.f32 %v1761, %v1764
    %1768 = vrot.lane.b32.xlu0 %v1766, 64
    %v1769 = vpop.permute.xlu0 %1768
    %v1771 = vadd.f32 %v1684, %v1769
    %v1772 = vtanh.pop %v1771
    %v1773 = vsub.f32 1.0, %v1761
    %1775 = vrot.lane.b32.xlu0 %v1772, 96
    %v1776 = vpop.permute.xlu0 %1775
    %v1778 = vmul.f32 %v1773, %v1776
    %v1779 = vmul.f32 %v1761, %v1595
    %v1780 = vadd.f32 %v1778, %v1779
    %s1781 = scalar_lea.vmem [#allocation3], 448
    %v1782 = vld [vmem:[%s1781] sm:$0xff]
    %v1783 = vld [vmem:[%s1781 + $0x8] sm:$0xff]
    %v1784 = vld [vmem:[%s1781 + $0x10] sm:$0xff]
    %v1785 = vld [vmem:[%s1781 + $0x18] sm:$0xff]
    %v1786 = vld [vmem:[%s1781 + $0x20] sm:$0xff]
    %v1787 = vld [vmem:[%s1781 + $0x28] sm:$0xff]
    %v1788 = vld [vmem:[%s1781 + $0x30] sm:$0xff]
    %v1789 = vld [vmem:[%s1781 + $0x38] sm:$0xff]
    %1791 = vrot.lane.b32.xlu0 %v1780, 96
    %v1792 = vpop.permute.xlu0 %1791
    %v1793 = vsel %vm227, %v1792, 0
    %1795 = vmatprep.subr.mxu0 0.0
    %1796 = vmatpush1.msra.mxu0 0.0
    %1797 = vmatprep.subr.mxu0 0.0
    %1798 = vmatpush1.msra.mxu0 0.0
    %1799 = vmatprep.subr.mxu0 0.0
    %1800 = vmatpush1.msra.mxu0 0.0
    %1801 = vmatprep.subr.mxu0 0.0
    %1802 = vmatpush1.msra.mxu0 0.0
    %1803 = vmatprep.subr.mxu0 0.0
    %1804 = vmatpush1.msra.mxu0 0.0
    %1805 = vmatprep.subr.mxu0 0.0
    %1806 = vmatpush1.msra.mxu0 0.0
    %1807 = vmatprep.subr.mxu0 0.0
    %1808 = vmatpush1.msra.mxu0 0.0
    %1809 = vmatprep.subr.mxu0 0.0
    %1810 = vmatpush1.msra.mxu0 0.0
    %1811 = vmatprep.subr.mxu0 0.0
    %1812 = vmatpush1.msra.mxu0 0.0
    %1813 = vmatprep.subr.mxu0 0.0
    %1814 = vmatpush1.msra.mxu0 0.0
    %1815 = vmatprep.subr.mxu0 0.0
    %1816 = vmatpush1.msra.mxu0 0.0
    %1817 = vmatprep.subr.mxu0 0.0
    %1818 = vmatpush1.msra.mxu0 0.0
    %1819 = vmatprep.subr.mxu0 %v1789
    %1820 = vmatpush1.msra.mxu0 %v1788
    %1821 = vmatprep.subr.mxu0 %v1787
    %1822 = vmatpush1.msra.mxu0 %v1786
    %1823 = vmatprep.subr.mxu0 %v1785
    %1824 = vmatpush1.msra.mxu0 %v1784
    %1825 = vmatprep.subr.mxu0 %v1783
    %1826 = vmatpush1.msra.mxu0 %v1782
    %1827 = vmatprep.subr.mxu0 0.0
    %1828 = vmatpush2.msra.mxu0 0.0
    %1829 = vmatprep.subr.mxu0 0.0
    %1830 = vmatpush2.msra.mxu0 0.0
    %1831 = vmatprep.subr.mxu0 0.0
    %1832 = vmatpush2.msra.mxu0 0.0
    %1833 = vmatprep.subr.mxu0 0.0
    %1834 = vmatpush2.msra.mxu0 0.0
    %1835 = vmatprep.subr.mxu0 0.0
    %1836 = vmatpush2.msra.mxu0 0.0
    %1837 = vmatprep.subr.mxu0 0.0
    %1838 = vmatpush2.msra.mxu0 0.0
    %1839 = vmatprep.subr.mxu0 0.0
    %1840 = vmatpush2.msra.mxu0 0.0
    %1841 = vmatprep.subr.mxu0 0.0
    %1842 = vmatpush2.msra.mxu0 0.0
    %1843 = vmatprep.subr.mxu0 0.0
    %1844 = vmatpush2.msra.mxu0 0.0
    %1845 = vmatprep.subr.mxu0 0.0
    %1846 = vmatpush2.msra.mxu0 0.0
    %1847 = vmatprep.subr.mxu0 0.0
    %1848 = vmatpush2.msra.mxu0 0.0
    %1849 = vmatprep.subr.mxu0 0.0
    %1850 = vmatpush2.msra.mxu0 0.0
    %1851 = vmatprep.subr.mxu0 0.0
    %1852 = vmatpush2.msra.mxu0 0.0
    %1853 = vmatprep.subr.mxu0 0.0
    %1854 = vmatpush2.msra.mxu0 0.0
    %1855 = vmatprep.subr.mxu0 0.0
    %1856 = vmatpush2.msra.mxu0 0.0
    %1857 = vmatprep.subr.mxu0 0.0
    %1858 = vmatpush2.msra.mxu0 0.0
    %1859 = vmatprep.mubr.f32.mxu0 0.0
    %1860 = vmatmul.mubr.f32.gmra.mxu0 %v1793
    %v1861 = vpop.f32.mrf.mxu0
    %v1862 = vadd.f32 0.0, %v1861
    %v1863 = vpop.f32.mrf.mxu0
    %v1864 = vadd.f32 0.0, %v1863
    %1865 = vdwg.mxu0
    %v1866 = vadd.f32 %v1681, %v1862
    %v1867 = vadd.f32 %v1682, %v1864
    %v1868 = vmax.f32 %v1866, 0.0
    %v1869 = vmax.f32 %v1867, 0.0
    %v1870 = vld [vmem:[#allocation5] sm:$0xff]
    %v1871 = vld [vmem:[#allocation5 + $0x8] sm:$0xff]
    %v1872 = vld [vmem:[#allocation5 + $0x10] sm:$0xff]
    %v1873 = vld [vmem:[#allocation5 + $0x18] sm:$0xff]
    %v1874 = vld [vmem:[#allocation5 + $0x20] sm:$0xff]
    %v1875 = vld [vmem:[#allocation5 + $0x28] sm:$0xff]
    %v1876 = vld [vmem:[#allocation5 + $0x30] sm:$0xff]
    %v1877 = vld [vmem:[#allocation5 + $0x38] sm:$0xff]
    %v1878 = vld [vmem:[#allocation5 + $0x40] sm:$0xff]
    %v1879 = vld [vmem:[#allocation5 + $0x48] sm:$0xff]
    %v1880 = vld [vmem:[#allocation5 + $0x50] sm:$0xff]
    %v1881 = vld [vmem:[#allocation5 + $0x58] sm:$0xff]
    %v1882 = vld [vmem:[#allocation5 + $0x60] sm:$0xff]
    %v1883 = vld [vmem:[#allocation5 + $0x68] sm:$0xff]
    %v1884 = vld [vmem:[#allocation5 + $0x70] sm:$0xff]
    %v1885 = vld [vmem:[#allocation5 + $0x78] sm:$0xff]
    %v1886 = vld [vmem:[#allocation5 + $0x80] sm:$0xff]
    %v1887 = vld [vmem:[#allocation5 + $0x88] sm:$0xff]
    %v1888 = vld [vmem:[#allocation5 + $0x90] sm:$0xff]
    %v1889 = vld [vmem:[#allocation5 + $0x98] sm:$0xff]
    %v1890 = vld [vmem:[#allocation5 + $0xa0] sm:$0xff]
    %v1891 = vld [vmem:[#allocation5 + $0xa8] sm:$0xff]
    %v1892 = vld [vmem:[#allocation5 + $0xb0] sm:$0xff]
    %v1893 = vld [vmem:[#allocation5 + $0xb8] sm:$0xff]
    %v1894 = vld [vmem:[#allocation5 + $0xc0] sm:$0xff]
    %v1895 = vld [vmem:[#allocation5 + $0xc8] sm:$0xff]
    %v1896 = vld [vmem:[#allocation5 + $0xd0] sm:$0xff]
    %v1897 = vld [vmem:[#allocation5 + $0xd8] sm:$0xff]
    %v1898 = vld [vmem:[#allocation5 + $0xe0] sm:$0xff]
    %v1899 = vld [vmem:[#allocation5 + $0xe8] sm:$0xff]
    %v1900 = vld [vmem:[#allocation5 + $0xf0] sm:$0xff]
    %v1901 = vld [vmem:[#allocation5 + $0xf8] sm:$0xff]
    %v1902 = vld [vmem:[%s9] sm:$0x1]
    %v1904 = vlaneseq
    %v1905 = vshrl.u32 %v1904, 7
    %v1906 = vsub.s32 0, %v1905
    %v1907 = vrot.slane %v1902, %v1906
    %1909 = vmatprep.subr.mxu0 0.0
    %1910 = vmatpush1.msra.mxu0 %v1885
    %1911 = vmatprep.subr.mxu0 0.0
    %1912 = vmatpush1.msra.mxu0 %v1884
    %1913 = vmatprep.subr.mxu0 0.0
    %1914 = vmatpush1.msra.mxu0 %v1883
    %1915 = vmatprep.subr.mxu0 0.0
    %1916 = vmatpush1.msra.mxu0 %v1882
    %1917 = vmatprep.subr.mxu0 0.0
    %1918 = vmatpush1.msra.mxu0 %v1881
    %1919 = vmatprep.subr.mxu0 0.0
    %1920 = vmatpush1.msra.mxu0 %v1880
    %1921 = vmatprep.subr.mxu0 0.0
    %1922 = vmatpush1.msra.mxu0 %v1879
    %1923 = vmatprep.subr.mxu0 0.0
    %1924 = vmatpush1.msra.mxu0 %v1878
    %1925 = vmatprep.subr.mxu0 0.0
    %1926 = vmatpush1.msra.mxu0 %v1877
    %1927 = vmatprep.subr.mxu0 0.0
    %1928 = vmatpush1.msra.mxu0 %v1876
    %1929 = vmatprep.subr.mxu0 0.0
    %1930 = vmatpush1.msra.mxu0 %v1875
    %1931 = vmatprep.subr.mxu0 0.0
    %1932 = vmatpush1.msra.mxu0 %v1874
    %1933 = vmatprep.subr.mxu0 0.0
    %1934 = vmatpush1.msra.mxu0 %v1873
    %1935 = vmatprep.subr.mxu0 0.0
    %1936 = vmatpush1.msra.mxu0 %v1872
    %1937 = vmatprep.subr.mxu0 0.0
    %1938 = vmatpush1.msra.mxu0 %v1871
    %1939 = vmatprep.subr.mxu0 0.0
    %1940 = vmatpush1.msra.mxu0 %v1870
    %1941 = vmatprep.subr.mxu0 0.0
    %1942 = vmatpush2.msra.mxu0 %v1901
    %1943 = vmatprep.subr.mxu0 0.0
    %1944 = vmatpush2.msra.mxu0 %v1900
    %1945 = vmatprep.subr.mxu0 0.0
    %1946 = vmatpush2.msra.mxu0 %v1899
    %1947 = vmatprep.subr.mxu0 0.0
    %1948 = vmatpush2.msra.mxu0 %v1898
    %1949 = vmatprep.subr.mxu0 0.0
    %1950 = vmatpush2.msra.mxu0 %v1897
    %1951 = vmatprep.subr.mxu0 0.0
    %1952 = vmatpush2.msra.mxu0 %v1896
    %1953 = vmatprep.subr.mxu0 0.0
    %1954 = vmatpush2.msra.mxu0 %v1895
    %1955 = vmatprep.subr.mxu0 0.0
    %1956 = vmatpush2.msra.mxu0 %v1894
    %1957 = vmatprep.subr.mxu0 0.0
    %1958 = vmatpush2.msra.mxu0 %v1893
    %1959 = vmatprep.subr.mxu0 0.0
    %1960 = vmatpush2.msra.mxu0 %v1892
    %1961 = vmatprep.subr.mxu0 0.0
    %1962 = vmatpush2.msra.mxu0 %v1891
    %1963 = vmatprep.subr.mxu0 0.0
    %1964 = vmatpush2.msra.mxu0 %v1890
    %1965 = vmatprep.subr.mxu0 0.0
    %1966 = vmatpush2.msra.mxu0 %v1889
    %1967 = vmatprep.subr.mxu0 0.0
    %1968 = vmatpush2.msra.mxu0 %v1888
    %1969 = vmatprep.subr.mxu0 0.0
    %1970 = vmatpush2.msra.mxu0 %v1887
    %1971 = vmatprep.subr.mxu0 0.0
    %1972 = vmatpush2.msra.mxu0 %v1886
    %1973 = vmatprep.mubr.f32.mxu0 %v1869
    %1974 = vmatmul.mubr.f32.gmra.mxu0 %v1868
    %v1975 = vpop.f32.mrf.mxu0
    %v1976 = vadd.f32 %v1907, %v1975
    %v1977 = vpop.f32.mrf.mxu0
    %1978 = vdwg.mxu0
    %v1979 = vmax.f32 %v1976, 0.0
    %v1980 = vlaneseq
    %v1981 = vand.u32 %v1980, 127
    %vm1982 = vcmp.lt.s32.totalorder %v1981, 5
    %v1983 = vsel %vm1982, 1, 0
    %vm1984 = vcmp.eq.s32.totalorder %v1983, 1
    %v1985 = vsel %vm1984, %v1979, -1e+30
    %1986 = vmax.xlane.f32.xlu0 %v1985
    %v1987 = vpop.xlane.xlu0 %1986
    %v1988 = vsub.f32 %v1985, %v1987
    %v1989 = vmul.f32 %v1988, 1.442695
    %v1990 = vpow.pop %v1989
    %1991 = vadd.xlane.f32.xlu0 %v1990
    %v1992 = vpop.xlane.xlu0 %1991
    %v1993 = vlog2.pop %v1992
    %v1994 = vmul.f32 %v1993, 0.6931472
    %v1995 = vadd.f32 %v1994, %v1987
    %v1996 = vsub.f32 %v1985, %v1995
    %1997 = vst [vmem:[%s10] sm:$0xff] %v1996
    // Predicated region
    $region50: #{rnnbase_forward.1} parent=1 // pred_check
      _
    $region51: #{rnnbase_forward.1} parent=1 // pred_check_branch
      %1999 = sbr.rel (0) target = $region53
    $region52: #{rnnbase_forward.1} parent=1 // pred_region
      _
    $region53: #{rnnbase_forward.1} parent=1 // pred_fallthru
      _
    // Predicated region
    $region54: #{rnnbase_forward.1} parent=1 // pred_check
      _
    $region55: #{rnnbase_forward.1} parent=1 // pred_check_branch
      %2001 = sbr.rel (0) target = $region57
    $region56: #{rnnbase_forward.1} parent=1 // pred_region
      _
    $region57: #{rnnbase_forward.1} parent=1 // pred_fallthru
      _
    %2002 = vsyncpa [#allocation4], 1
    %2003 = vsyncpa [#allocation6], 1

</llo_original>
